<compile_context>
chip_gen: v5e
topology: v5e:2x2
jax: 0.10.0
libtpu: 0.0.40
codegen_flags: <defaults>
</compile_context>

<pallas_src>
import jax
import jax.numpy as jnp
from jax import lax
from jax.experimental import pallas as pl
from jax.experimental.pallas import tpu as pltpu


def _round_up(x, m):
    return ((x + m - 1) // m) * m


def _pick_vmem_limit(required_bytes):
    """VMEM budget for this kernel: 2x the computed requirement (headroom for
    double-buffering / internal scratch), at least 8 MiB, but never more than
    half the chip's physical VMEM (v7x only has 64 MiB per TensorCore)."""
    try:
        cap = int(pltpu.get_tpu_info().vmem_capacity_bytes)
    except Exception:  # pragma: no cover - conservative fallback
        cap = 64 * 1024 * 1024
    want = max(2 * int(required_bytes), 8 * 1024 * 1024)
    return int(min(want, cap // 2))


def net1_kernel(x_ref, w0_ref, b0_ref, w1_ref, b1_ref, w2_ref, b2_ref, o_ref):
    wdt = w1_ref.dtype

    # Input Linear + ReLU.  (Dropout == identity in eval mode.)
    h = jnp.dot(x_ref[...].astype(wdt), w0_ref[...],
                preferred_element_type=jnp.float32)
    h = jnp.maximum(h + b0_ref[...], 0.0)
    # TODO(synk): training-mode dropout RNG not implemented (eval mode -> identity)

    num_blocks = w1_ref.shape[0]

    def block(k, h):
        t = jnp.dot(h.astype(wdt), w1_ref[k], preferred_element_type=jnp.float32)
        t = jnp.maximum(t + b1_ref[k], 0.0)
        t = jnp.dot(t.astype(wdt), w2_ref[k], preferred_element_type=jnp.float32)
        return jnp.maximum(t + b2_ref[k] + h, 0.0)

    # Static trip count, fully unrolled -> all weight reads are static slices.
    h = lax.fori_loop(0, num_blocks, block, h, unroll=True)
    o_ref[...] = h


def net1_forward(x, params, *, batch_tile=256):
    """x: (B, F) fp32.  params: dict of stacked weights (see make_params)."""
    w0, b0 = params["w0"], params["b0"]
    w1, b1 = params["w1"], params["b1"]
    w2, b2 = params["w2"], params["b2"]

    B, F = x.shape
    N = w0.shape[1]
    NB = w1.shape[0]
    assert NB >= 1, "need at least one residual block"

    # Batch tile: multiple of 8 (sublane), no larger than the padded batch.
    batch_tile = max(8, min(_round_up(batch_tile, 8), _round_up(B, 8)))
    Bp = _round_up(B, batch_tile)
    if Bp != B:
        x = jnp.pad(x, ((0, Bp - B), (0, 0)))
    num_tiles = Bp // batch_tile

    wbytes = jnp.dtype(w1.dtype).itemsize
    weight_bytes = (F * N * wbytes                 # W0
                    + 2 * NB * N * N * wbytes      # W1 + W2 stacks
                    + (2 * NB + 1) * N * 4)        # biases (fp32)
    act_bytes = batch_tile * (F + N) * 4           # x tile + out tile
    # 2x for double-buffered blocks, plus fp32 temporaries (h, t) in the body.
    required = 2 * weight_bytes + 2 * act_bytes + 4 * batch_tile * N * 4
    vmem_limit = _pick_vmem_limit(required)
    assert 2 * weight_bytes + 2 * act_bytes <= vmem_limit, (
        "weight stack does not fit VMEM for the resident-weight kernel; "
        "reduce num_neurons / num_residual_blocks")
    # TODO(synk): stream W1/W2 per-block (extra 'arbitrary' grid axis, batch_tile
    # above the weight-streaming roofline) when NB*N^2 no longer fits VMEM.

    cost = pl.CostEstimate(
        flops=2 * Bp * N * (F + 2 * NB * N),
        transcendentals=0,
        bytes_accessed=(Bp * F * x.dtype.itemsize   # x in
                        + Bp * N * 4                # out
                        + weight_bytes),            # weights fetched once
    )

    out = pl.pallas_call(
        net1_kernel,
        out_shape=jax.ShapeDtypeStruct((Bp, N), jnp.float32),
        grid_spec=pltpu.PrefetchScalarGridSpec(
            num_scalar_prefetch=0,
            grid=(num_tiles,),                                  # batch tiles only
            in_specs=[
                pl.BlockSpec((batch_tile, F), lambda i: (i, 0)),      # x tile
                pl.BlockSpec((F, N),          lambda i: (0, 0)),      # W0 (resident)
                pl.BlockSpec((1, N),          lambda i: (0, 0)),      # b0 (resident)
                pl.BlockSpec((NB, N, N),      lambda i: (0, 0, 0)),   # W1 stack (resident)
                pl.BlockSpec((NB, 1, N),      lambda i: (0, 0, 0)),   # b1 stack (resident)
                pl.BlockSpec((NB, N, N),      lambda i: (0, 0, 0)),   # W2 stack (resident)
                pl.BlockSpec((NB, 1, N),      lambda i: (0, 0, 0)),   # b2 stack (resident)
            ],
            out_specs=pl.BlockSpec((batch_tile, N), lambda i: (i, 0)),
        ),
        compiler_params=pltpu.CompilerParams(
            dimension_semantics=("parallel",),
            vmem_limit_bytes=vmem_limit,
        ),
        cost_estimate=cost,
    )(x, w0, b0, w1, b1, w2, b2)
    return out[:B]


def make_params(key, num_features, num_residual_blocks, num_neurons,
                weight_dtype=jnp.float32):
    """Deterministic synthetic parameters, stored (in, out) for y = x @ W + b.
    fp32 weights by default (small-N / VALU-bound regime: no casts); pass
    jnp.bfloat16 for large N to halve weight VMEM / HBM traffic."""
    ks = jax.random.split(key, 6)
    s_in = 1.0 / (num_features ** 0.5)
    s_h = 1.0 / (num_neurons ** 0.5)

    def u(k, shape, s, dt):
        return jax.random.uniform(k, shape, minval=-s, maxval=s,
                                  dtype=jnp.float32).astype(dt)

    return {
        "w0": u(ks[0], (num_features, num_neurons), s_in, weight_dtype),
        "b0": u(ks[1], (1, num_neurons), s_in, jnp.float32),
        "w1": u(ks[2], (num_residual_blocks, num_neurons, num_neurons), s_h, weight_dtype),
        "b1": u(ks[3], (num_residual_blocks, 1, num_neurons), s_h, jnp.float32),
        "w2": u(ks[4], (num_residual_blocks, num_neurons, num_neurons), s_h, weight_dtype),
        "b2": u(ks[5], (num_residual_blocks, 1, num_neurons), s_h, jnp.float32),
    }


def net1_reference(x, params):
    """Pure-JAX reference of the same forward (eval-mode dropout, same casts)."""
    wdt = params["w0"].dtype
    h = jnp.dot(x.astype(wdt), params["w0"], preferred_element_type=jnp.float32)
    h = jnp.maximum(h + params["b0"], 0.0)
    for blk in range(params["w1"].shape[0]):
        identity = h
        t = jnp.dot(h.astype(wdt), params["w1"][blk], preferred_element_type=jnp.float32)
        t = jnp.maximum(t + params["b1"][blk], 0.0)
        t = jnp.dot(t.astype(wdt), params["w2"][blk], preferred_element_type=jnp.float32)
        h = jnp.maximum(t + params["b2"][blk] + identity, 0.0)
    return h


if __name__ == "__main__":
    # Small shapes consistent with the module: 2-D (batch, features) input.
    # N is a multiple of 128 (lane-dense output); batch_tile=256 collapses the
    # demo-scale forward to a single grid step with all weights VMEM-resident.
    batch = 256
    num_features = 16
    num_neurons = 128
    num_residual_blocks = 3

    key = jax.random.PRNGKey(0)
    kx, kp = jax.random.split(key)
    x = jax.random.normal(kx, (batch, num_features), dtype=jnp.float32)
    params = make_params(kp, num_features, num_residual_blocks, num_neurons)

    out = net1_forward(x, params, batch_tile=256)
    out = jax.block_until_ready(out)

    ref = net1_reference(x, params)
    assert out.shape == (batch, num_neurons)
    assert jnp.allclose(out, ref, atol=2e-3, rtol=2e-3), "Pallas kernel mismatch vs reference"

    print("KERNEL_OK")
</pallas_src>

<mosaic_0001>
module attributes {stable_mosaic.version = 11 : i64} {
  func.func @net1_kernel(%arg0: i32, %arg1: memref<256x16xf32, #tpu.memory_space<vmem>>, %arg2: memref<16x128xf32, #tpu.memory_space<vmem>>, %arg3: memref<1x128xf32, #tpu.memory_space<vmem>>, %arg4: memref<3x128x128xf32, #tpu.memory_space<vmem>>, %arg5: memref<3x1x128xf32, #tpu.memory_space<vmem>>, %arg6: memref<3x128x128xf32, #tpu.memory_space<vmem>>, %arg7: memref<3x1x128xf32, #tpu.memory_space<vmem>>, %arg8: memref<256x128xf32, #tpu.memory_space<vmem>>) attributes {dimension_semantics = [#tpu.dimension_semantics<parallel>], iteration_bounds = array<i64: 1>, scalar_prefetch = 0 : i64, scratch_operands = 0 : i64, tpu.core_type = #tpu.core_type<tc>, window_params = [{transform_indices = @transform_0, window_bounds = array<i64: 256, 16>}, {pipeline_mode = #tpu.pipeline_mode<synchronous>, transform_indices = @transform_1, window_bounds = array<i64: 16, 128>}, {pipeline_mode = #tpu.pipeline_mode<synchronous>, transform_indices = @transform_2, window_bounds = array<i64: 1, 128>}, {pipeline_mode = #tpu.pipeline_mode<synchronous>, transform_indices = @transform_3, window_bounds = array<i64: 3, 128, 128>}, {pipeline_mode = #tpu.pipeline_mode<synchronous>, transform_indices = @transform_4, window_bounds = array<i64: 3, 1, 128>}, {pipeline_mode = #tpu.pipeline_mode<synchronous>, transform_indices = @transform_5, window_bounds = array<i64: 3, 128, 128>}, {pipeline_mode = #tpu.pipeline_mode<synchronous>, transform_indices = @transform_6, window_bounds = array<i64: 3, 1, 128>}, {transform_indices = @transform_7, window_bounds = array<i64: 256, 128>}]} {
    %c0 = arith.constant 0 : index
    %c0_0 = arith.constant 0 : index
    %0 = vector.load %arg1[%c0, %c0_0] : memref<256x16xf32, #tpu.memory_space<vmem>>, vector<256x16xf32>
    %c0_1 = arith.constant 0 : index
    %c0_2 = arith.constant 0 : index
    %1 = vector.load %arg2[%c0_1, %c0_2] : memref<16x128xf32, #tpu.memory_space<vmem>>, vector<16x128xf32>
    %cst = arith.constant dense<0.000000e+00> : vector<256x128xf32>
    %2 = tpu.matmul %0, %1, %cst {dimension_numbers = #tpu.dot_dimension_numbers<[1], [0], [0], [1], [0, 0, 1, 1], [], []>} : vector<256x16xf32>, vector<16x128xf32>, vector<256x128xf32> -> vector<256x128xf32>
    %c0_3 = arith.constant 0 : index
    %c0_4 = arith.constant 0 : index
    %3 = vector.load %arg3[%c0_3, %c0_4] : memref<1x128xf32, #tpu.memory_space<vmem>>, vector<1x128xf32>
    %4 = vector.broadcast %3 : vector<1x128xf32> to vector<256x128xf32>
    %5 = arith.addf %2, %4 : vector<256x128xf32>
    %cst_5 = arith.constant 0.000000e+00 : f32
    %6 = vector.broadcast %cst_5 : f32 to vector<256x128xf32>
    %7 = arith.maximumf %5, %6 : vector<256x128xf32>
    %c0_i32 = arith.constant 0 : i32
    %8 = arith.index_cast %c0_i32 : i32 to index
    %c0_6 = arith.constant 0 : index
    %c0_7 = arith.constant 0 : index
    %9 = vector.load %arg4[%8, %c0_6, %c0_7] : memref<3x128x128xf32, #tpu.memory_space<vmem>>, vector<1x128x128xf32>
    %10 = vector.shape_cast %9 : vector<1x128x128xf32> to vector<128x128xf32>
    %cst_8 = arith.constant dense<0.000000e+00> : vector<256x128xf32>
    %11 = tpu.matmul %7, %10, %cst_8 {dimension_numbers = #tpu.dot_dimension_numbers<[1], [0], [0], [1], [0, 0, 1, 1], [], []>} : vector<256x128xf32>, vector<128x128xf32>, vector<256x128xf32> -> vector<256x128xf32>
    %12 = arith.index_cast %c0_i32 : i32 to index
    %c0_9 = arith.constant 0 : index
    %c0_10 = arith.constant 0 : index
    %13 = vector.load %arg5[%12, %c0_9, %c0_10] : memref<3x1x128xf32, #tpu.memory_space<vmem>>, vector<1x1x128xf32>
    %14 = vector.shape_cast %13 : vector<1x1x128xf32> to vector<1x128xf32>
    %15 = vector.broadcast %14 : vector<1x128xf32> to vector<256x128xf32>
    %16 = arith.addf %11, %15 : vector<256x128xf32>
    %cst_11 = arith.constant 0.000000e+00 : f32
    %17 = vector.broadcast %cst_11 : f32 to vector<256x128xf32>
    %18 = arith.maximumf %16, %17 : vector<256x128xf32>
    %19 = arith.index_cast %c0_i32 : i32 to index
    %c0_12 = arith.constant 0 : index
    %c0_13 = arith.constant 0 : index
    %20 = vector.load %arg6[%19, %c0_12, %c0_13] : memref<3x128x128xf32, #tpu.memory_space<vmem>>, vector<1x128x128xf32>
    %21 = vector.shape_cast %20 : vector<1x128x128xf32> to vector<128x128xf32>
    %cst_14 = arith.constant dense<0.000000e+00> : vector<256x128xf32>
    %22 = tpu.matmul %18, %21, %cst_14 {dimension_numbers = #tpu.dot_dimension_numbers<[1], [0], [0], [1], [0, 0, 1, 1], [], []>} : vector<256x128xf32>, vector<128x128xf32>, vector<256x128xf32> -> vector<256x128xf32>
    %23 = arith.index_cast %c0_i32 : i32 to index
    %c0_15 = arith.constant 0 : index
    %c0_16 = arith.constant 0 : index
    %24 = vector.load %arg7[%23, %c0_15, %c0_16] : memref<3x1x128xf32, #tpu.memory_space<vmem>>, vector<1x1x128xf32>
    %25 = vector.shape_cast %24 : vector<1x1x128xf32> to vector<1x128xf32>
    %26 = vector.broadcast %25 : vector<1x128xf32> to vector<256x128xf32>
    %27 = arith.addf %22, %26 : vector<256x128xf32>
    %28 = arith.addf %27, %7 : vector<256x128xf32>
    %cst_17 = arith.constant 0.000000e+00 : f32
    %29 = vector.broadcast %cst_17 : f32 to vector<256x128xf32>
    %30 = arith.maximumf %28, %29 : vector<256x128xf32>
    %c1_i32 = arith.constant 1 : i32
    %31 = arith.index_cast %c1_i32 : i32 to index
    %c0_18 = arith.constant 0 : index
    %c0_19 = arith.constant 0 : index
    %32 = vector.load %arg4[%31, %c0_18, %c0_19] : memref<3x128x128xf32, #tpu.memory_space<vmem>>, vector<1x128x128xf32>
    %33 = vector.shape_cast %32 : vector<1x128x128xf32> to vector<128x128xf32>
    %cst_20 = arith.constant dense<0.000000e+00> : vector<256x128xf32>
    %34 = tpu.matmul %30, %33, %cst_20 {dimension_numbers = #tpu.dot_dimension_numbers<[1], [0], [0], [1], [0, 0, 1, 1], [], []>} : vector<256x128xf32>, vector<128x128xf32>, vector<256x128xf32> -> vector<256x128xf32>
    %35 = arith.index_cast %c1_i32 : i32 to index
    %c0_21 = arith.constant 0 : index
    %c0_22 = arith.constant 0 : index
    %36 = vector.load %arg5[%35, %c0_21, %c0_22] : memref<3x1x128xf32, #tpu.memory_space<vmem>>, vector<1x1x128xf32>
    %37 = vector.shape_cast %36 : vector<1x1x128xf32> to vector<1x128xf32>
    %38 = vector.broadcast %37 : vector<1x128xf32> to vector<256x128xf32>
    %39 = arith.addf %34, %38 : vector<256x128xf32>
    %cst_23 = arith.constant 0.000000e+00 : f32
    %40 = vector.broadcast %cst_23 : f32 to vector<256x128xf32>
    %41 = arith.maximumf %39, %40 : vector<256x128xf32>
    %42 = arith.index_cast %c1_i32 : i32 to index
    %c0_24 = arith.constant 0 : index
    %c0_25 = arith.constant 0 : index
    %43 = vector.load %arg6[%42, %c0_24, %c0_25] : memref<3x128x128xf32, #tpu.memory_space<vmem>>, vector<1x128x128xf32>
    %44 = vector.shape_cast %43 : vector<1x128x128xf32> to vector<128x128xf32>
    %cst_26 = arith.constant dense<0.000000e+00> : vector<256x128xf32>
    %45 = tpu.matmul %41, %44, %cst_26 {dimension_numbers = #tpu.dot_dimension_numbers<[1], [0], [0], [1], [0, 0, 1, 1], [], []>} : vector<256x128xf32>, vector<128x128xf32>, vector<256x128xf32> -> vector<256x128xf32>
    %46 = arith.index_cast %c1_i32 : i32 to index
    %c0_27 = arith.constant 0 : index
    %c0_28 = arith.constant 0 : index
    %47 = vector.load %arg7[%46, %c0_27, %c0_28] : memref<3x1x128xf32, #tpu.memory_space<vmem>>, vector<1x1x128xf32>
    %48 = vector.shape_cast %47 : vector<1x1x128xf32> to vector<1x128xf32>
    %49 = vector.broadcast %48 : vector<1x128xf32> to vector<256x128xf32>
    %50 = arith.addf %45, %49 : vector<256x128xf32>
    %51 = arith.addf %50, %30 : vector<256x128xf32>
    %cst_29 = arith.constant 0.000000e+00 : f32
    %52 = vector.broadcast %cst_29 : f32 to vector<256x128xf32>
    %53 = arith.maximumf %51, %52 : vector<256x128xf32>
    %c2_i32 = arith.constant 2 : i32
    %54 = arith.index_cast %c2_i32 : i32 to index
    %c0_30 = arith.constant 0 : index
    %c0_31 = arith.constant 0 : index
    %55 = vector.load %arg4[%54, %c0_30, %c0_31] : memref<3x128x128xf32, #tpu.memory_space<vmem>>, vector<1x128x128xf32>
    %56 = vector.shape_cast %55 : vector<1x128x128xf32> to vector<128x128xf32>
    %cst_32 = arith.constant dense<0.000000e+00> : vector<256x128xf32>
    %57 = tpu.matmul %53, %56, %cst_32 {dimension_numbers = #tpu.dot_dimension_numbers<[1], [0], [0], [1], [0, 0, 1, 1], [], []>} : vector<256x128xf32>, vector<128x128xf32>, vector<256x128xf32> -> vector<256x128xf32>
    %58 = arith.index_cast %c2_i32 : i32 to index
    %c0_33 = arith.constant 0 : index
    %c0_34 = arith.constant 0 : index
    %59 = vector.load %arg5[%58, %c0_33, %c0_34] : memref<3x1x128xf32, #tpu.memory_space<vmem>>, vector<1x1x128xf32>
    %60 = vector.shape_cast %59 : vector<1x1x128xf32> to vector<1x128xf32>
    %61 = vector.broadcast %60 : vector<1x128xf32> to vector<256x128xf32>
    %62 = arith.addf %57, %61 : vector<256x128xf32>
    %cst_35 = arith.constant 0.000000e+00 : f32
    %63 = vector.broadcast %cst_35 : f32 to vector<256x128xf32>
    %64 = arith.maximumf %62, %63 : vector<256x128xf32>
    %65 = arith.index_cast %c2_i32 : i32 to index
    %c0_36 = arith.constant 0 : index
    %c0_37 = arith.constant 0 : index
    %66 = vector.load %arg6[%65, %c0_36, %c0_37] : memref<3x128x128xf32, #tpu.memory_space<vmem>>, vector<1x128x128xf32>
    %67 = vector.shape_cast %66 : vector<1x128x128xf32> to vector<128x128xf32>
    %cst_38 = arith.constant dense<0.000000e+00> : vector<256x128xf32>
    %68 = tpu.matmul %64, %67, %cst_38 {dimension_numbers = #tpu.dot_dimension_numbers<[1], [0], [0], [1], [0, 0, 1, 1], [], []>} : vector<256x128xf32>, vector<128x128xf32>, vector<256x128xf32> -> vector<256x128xf32>
    %69 = arith.index_cast %c2_i32 : i32 to index
    %c0_39 = arith.constant 0 : index
    %c0_40 = arith.constant 0 : index
    %70 = vector.load %arg7[%69, %c0_39, %c0_40] : memref<3x1x128xf32, #tpu.memory_space<vmem>>, vector<1x1x128xf32>
    %71 = vector.shape_cast %70 : vector<1x1x128xf32> to vector<1x128xf32>
    %72 = vector.broadcast %71 : vector<1x128xf32> to vector<256x128xf32>
    %73 = arith.addf %68, %72 : vector<256x128xf32>
    %74 = arith.addf %73, %53 : vector<256x128xf32>
    %cst_41 = arith.constant 0.000000e+00 : f32
    %75 = vector.broadcast %cst_41 : f32 to vector<256x128xf32>
    %76 = arith.maximumf %74, %75 : vector<256x128xf32>
    %c3_i32 = arith.constant 3 : i32
    %c0_42 = arith.constant 0 : index
    %c0_43 = arith.constant 0 : index
    %77 = vector.load %arg8[%c0_42, %c0_43] : memref<256x128xf32, #tpu.memory_space<vmem>>, vector<256x128xf32>
    tpu.vector_store %arg8[%c0_42, %c0_43], %76 {strides = array<i32>} : memref<256x128xf32, #tpu.memory_space<vmem>>, vector<256x128xf32>,
    return
  }
  func.func @transform_0(%arg0: i32) -> (i32, i32) {
    %c0_i32 = arith.constant 0 : i32
    %c0_i32_0 = arith.constant 0 : i32
    return %arg0, %c0_i32 : i32, i32
  }
  func.func @transform_1(%arg0: i32) -> (i32, i32) {
    %c0_i32 = arith.constant 0 : i32
    %c0_i32_0 = arith.constant 0 : i32
    %c0_i32_1 = arith.constant 0 : i32
    return %c0_i32, %c0_i32_0 : i32, i32
  }
  func.func @transform_2(%arg0: i32) -> (i32, i32) {
    %c0_i32 = arith.constant 0 : i32
    %c0_i32_0 = arith.constant 0 : i32
    %c0_i32_1 = arith.constant 0 : i32
    return %c0_i32, %c0_i32_0 : i32, i32
  }
  func.func @transform_3(%arg0: i32) -> (i32, i32, i32) {
    %c0_i32 = arith.constant 0 : i32
    %c0_i32_0 = arith.constant 0 : i32
    %c0_i32_1 = arith.constant 0 : i32
    %c0_i32_2 = arith.constant 0 : i32
    return %c0_i32, %c0_i32_0, %c0_i32_1 : i32, i32, i32
  }
  func.func @transform_4(%arg0: i32) -> (i32, i32, i32) {
    %c0_i32 = arith.constant 0 : i32
    %c0_i32_0 = arith.constant 0 : i32
    %c0_i32_1 = arith.constant 0 : i32
    %c0_i32_2 = arith.constant 0 : i32
    return %c0_i32, %c0_i32_0, %c0_i32_1 : i32, i32, i32
  }
  func.func @transform_5(%arg0: i32) -> (i32, i32, i32) {
    %c0_i32 = arith.constant 0 : i32
    %c0_i32_0 = arith.constant 0 : i32
    %c0_i32_1 = arith.constant 0 : i32
    %c0_i32_2 = arith.constant 0 : i32
    return %c0_i32, %c0_i32_0, %c0_i32_1 : i32, i32, i32
  }
  func.func @transform_6(%arg0: i32) -> (i32, i32, i32) {
    %c0_i32 = arith.constant 0 : i32
    %c0_i32_0 = arith.constant 0 : i32
    %c0_i32_1 = arith.constant 0 : i32
    %c0_i32_2 = arith.constant 0 : i32
    return %c0_i32, %c0_i32_0, %c0_i32_1 : i32, i32, i32
  }
  func.func @transform_7(%arg0: i32) -> (i32, i32) {
    %c0_i32 = arith.constant 0 : i32
    %c0_i32_0 = arith.constant 0 : i32
    return %arg0, %c0_i32 : i32, i32
  }
}

</mosaic_0001>

<llo_original>
// kernel: tpu_custom_call.1
$region0: #{tpu_custom_call.1}
  #allocation0 [shape = 'u32[]', space=smem, size = 0x4, offset = 0x4, fixed_abs, tag = 'smem constant byte address 0x4 - core index']
  #allocation1 [shape = 'u32[72,128]{1,0:T(1,128)}', space=vmem, size = 0x9000, scoped, tag = 'internal scratch']
  %s0 = inlined_call_operand.vmem [shape: f32[256,16], index: 0, kind: input, shape index: {}]
  %s1 = inlined_call_operand.vmem [shape: f32[16,128], index: 1, kind: input, shape index: {}]
  %s2 = inlined_call_operand.vmem [shape: f32[1,128], index: 2, kind: input, shape index: {}]
  %s3 = inlined_call_operand.hbm [shape: f32[3,128,128], index: 3, kind: input, shape index: {}]
  %s4 = inlined_call_operand.vmem [shape: f32[3,1,128], index: 4, kind: input, shape index: {}]
  %s5 = inlined_call_operand.hbm [shape: f32[3,128,128], index: 5, kind: input, shape index: {}]
  %s6 = inlined_call_operand.vmem [shape: f32[3,1,128], index: 6, kind: input, shape index: {}]
  %s7 = inlined_call_operand.hbm [shape: f32[256,128], index: 7, kind: output, shape index: {}]
  %s8 = sld [smem:[#allocation0]]
  $region46: #{tpu_custom_call.1} parent=0
    _
  %s10 = ssub.s32 1, %s8
  %s11 = scalar_select 0, %s10, %s8
  $region1: #{tpu_custom_call.1} parent=0
    #allocation2 [shape = 'u8[196608]{0}', space=vmem, size = 0x30000, scoped, tag = 'input window, operand 3, single buffered']
    #allocation3 [shape = 's32[1]{0}', space=sflag, size = 0x4, scoped, tag = 'scoped memory for tpu_custom_call.1']
    #allocation4 [shape = 's32[1]{0}', space=sflag, size = 0x4, scoped, tag = 'scoped memory for tpu_custom_call.1']
    #allocation5 [shape = 'u8[196608]{0}', space=vmem, size = 0x30000, scoped, tag = 'input window, operand 5, single buffered']
    #allocation6 [shape = 's32[1]{0}', space=sflag, size = 0x4, scoped, tag = 'scoped memory for tpu_custom_call.1']
    #allocation7 [shape = 'u8[131072]{0}', space=vmem, size = 0x20000, scoped, tag = 'output window, operand 0, single buffered']
    %12 = vsyncpa [#allocation3], 0
    %13 = vsyncpa [#allocation6], 0
    %14 = vsyncpa [#allocation4], 0
    // Predicated region
    $region2: #{tpu_custom_call.1} parent=1 // pred_check
      _
    $region3: #{tpu_custom_call.1} parent=1 // pred_check_branch
      %16 = sbr.rel (0) target = $region5
    $region4: #{tpu_custom_call.1} parent=1 // pred_region
      _
    $region5: #{tpu_custom_call.1} parent=1 // pred_fallthru
      _
    // Predicated region
    $region6: #{tpu_custom_call.1} parent=1 // pred_check
      _
    $region7: #{tpu_custom_call.1} parent=1 // pred_check_branch
      %18 = sbr.rel (0) target = $region9
    $region8: #{tpu_custom_call.1} parent=1 // pred_region
      _
    $region9: #{tpu_custom_call.1} parent=1 // pred_fallthru
      _
    // Predicated region
    $region10: #{tpu_custom_call.1} parent=1 // pred_check
      _
    $region11: #{tpu_custom_call.1} parent=1 // pred_check_branch
      %20 = sbr.rel (0) target = $region13
    $region12: #{tpu_custom_call.1} parent=1 // pred_region
      _
    $region13: #{tpu_custom_call.1} parent=1 // pred_fallthru
      _
    // Predicated region
    $region14: #{tpu_custom_call.1} parent=1 // pred_check
      _
    $region15: #{tpu_custom_call.1} parent=1 // pred_check_branch
      %22 = sbr.rel (0) target = $region17
    $region16: #{tpu_custom_call.1} parent=1 // pred_region
      %24 = vsyncadd [#allocation3], 0
      %s25 = sshll.u32 %s3, 4
      %s26 = int_to_ptr.hbm [resolvable:$true] %s25
      %s27 = sshll.u32 [#allocation2], 4
      %s28 = int_to_ptr.vmem [resolvable:$true] %s27
      %33 = dma.hbm_to_vmem [thread:$0]  %s26, 6144, %s28, [#allocation3], 128, 128, 8
    $region17: #{tpu_custom_call.1} parent=1 // pred_fallthru
      _
    // Predicated region
    $region18: #{tpu_custom_call.1} parent=1 // pred_check
      _
    $region19: #{tpu_custom_call.1} parent=1 // pred_check_branch
      %35 = sbr.rel (0) target = $region21
    $region20: #{tpu_custom_call.1} parent=1 // pred_region
      _
    $region21: #{tpu_custom_call.1} parent=1 // pred_fallthru
      _
    // Predicated region
    $region22: #{tpu_custom_call.1} parent=1 // pred_check
      _
    $region23: #{tpu_custom_call.1} parent=1 // pred_check_branch
      %37 = sbr.rel (0) target = $region25
    $region24: #{tpu_custom_call.1} parent=1 // pred_region
      %39 = vsyncadd [#allocation6], 0
      %s40 = sshll.u32 %s5, 4
      %s41 = int_to_ptr.hbm [resolvable:$true] %s40
      %s42 = sshll.u32 [#allocation5], 4
      %s43 = int_to_ptr.vmem [resolvable:$true] %s42
      %48 = dma.hbm_to_vmem [thread:$0]  %s41, 6144, %s43, [#allocation6], 128, 128, 8
    $region25: #{tpu_custom_call.1} parent=1 // pred_fallthru
      _
    // Predicated region
    $region26: #{tpu_custom_call.1} parent=1 // pred_check
      _
    $region27: #{tpu_custom_call.1} parent=1 // pred_check_branch
      %50 = sbr.rel (0) target = $region29
    $region28: #{tpu_custom_call.1} parent=1 // pred_region
      _
    $region29: #{tpu_custom_call.1} parent=1 // pred_fallthru
      _
    // Predicated region
    $region30: #{tpu_custom_call.1} parent=1 // pred_check
      _
    $region31: #{tpu_custom_call.1} parent=1 // pred_check_branch
      %52 = sbr.rel (0) target = $region33
    $region32: #{tpu_custom_call.1} parent=1 // pred_region
      %54 = dma.done [#allocation3], 6144
    $region33: #{tpu_custom_call.1} parent=1 // pred_fallthru
      _
    // Predicated region
    $region34: #{tpu_custom_call.1} parent=1 // pred_check
      _
    $region35: #{tpu_custom_call.1} parent=1 // pred_check_branch
      %56 = sbr.rel (0) target = $region37
    $region36: #{tpu_custom_call.1} parent=1 // pred_region
      %58 = dma.done [#allocation6], 6144
    $region37: #{tpu_custom_call.1} parent=1 // pred_fallthru
      _
    %v59 = vld [vmem:[%s0] sm:$0xff]
    %v60 = vld [vmem:[%s0 + $0x8] sm:$0xff]
    %v61 = vld [vmem:[%s0 + $0x10] sm:$0xff]
    %v62 = vld [vmem:[%s0 + $0x18] sm:$0xff]
    %v63 = vld [vmem:[%s0 + $0x20] sm:$0xff]
    %v64 = vld [vmem:[%s0 + $0x28] sm:$0xff]
    %v65 = vld [vmem:[%s0 + $0x30] sm:$0xff]
    %v66 = vld [vmem:[%s0 + $0x38] sm:$0xff]
    %v67 = vld [vmem:[%s0 + $0x40] sm:$0xff]
    %v68 = vld [vmem:[%s0 + $0x48] sm:$0xff]
    %v69 = vld [vmem:[%s0 + $0x50] sm:$0xff]
    %v70 = vld [vmem:[%s0 + $0x58] sm:$0xff]
    %v71 = vld [vmem:[%s0 + $0x60] sm:$0xff]
    %v72 = vld [vmem:[%s0 + $0x68] sm:$0xff]
    %v73 = vld [vmem:[%s0 + $0x70] sm:$0xff]
    %v74 = vld [vmem:[%s0 + $0x78] sm:$0xff]
    %v75 = vld [vmem:[%s0 + $0x80] sm:$0xff]
    %v76 = vld [vmem:[%s0 + $0x88] sm:$0xff]
    %v77 = vld [vmem:[%s0 + $0x90] sm:$0xff]
    %v78 = vld [vmem:[%s0 + $0x98] sm:$0xff]
    %v79 = vld [vmem:[%s0 + $0xa0] sm:$0xff]
    %v80 = vld [vmem:[%s0 + $0xa8] sm:$0xff]
    %v81 = vld [vmem:[%s0 + $0xb0] sm:$0xff]
    %v82 = vld [vmem:[%s0 + $0xb8] sm:$0xff]
    %v83 = vld [vmem:[%s0 + $0xc0] sm:$0xff]
    %v84 = vld [vmem:[%s0 + $0xc8] sm:$0xff]
    %v85 = vld [vmem:[%s0 + $0xd0] sm:$0xff]
    %v86 = vld [vmem:[%s0 + $0xd8] sm:$0xff]
    %v87 = vld [vmem:[%s0 + $0xe0] sm:$0xff]
    %v88 = vld [vmem:[%s0 + $0xe8] sm:$0xff]
    %v89 = vld [vmem:[%s0 + $0xf0] sm:$0xff]
    %v90 = vld [vmem:[%s0 + $0xf8] sm:$0xff]
    %v91 = vld [vmem:[%s1] sm:$0xff]
    %v92 = vld [vmem:[%s1 + $0x8] sm:$0xff]
    %v93 = vld [vmem:[%s2] sm:$0x1]
    %v95 = vperm.slane %v93, 0
    %vm97 = vcmask 130048
    %v99 = vsel %vm97, %v59, 0
    %v102 = vsel %vm97, %v60, 0
    %v105 = vsel %vm97, %v61, 0
    %v108 = vsel %vm97, %v62, 0
    %v111 = vsel %vm97, %v63, 0
    %v114 = vsel %vm97, %v64, 0
    %v117 = vsel %vm97, %v65, 0
    %v120 = vsel %vm97, %v66, 0
    %v123 = vsel %vm97, %v67, 0
    %v126 = vsel %vm97, %v68, 0
    %v129 = vsel %vm97, %v69, 0
    %v132 = vsel %vm97, %v70, 0
    %v135 = vsel %vm97, %v71, 0
    %v138 = vsel %vm97, %v72, 0
    %v141 = vsel %vm97, %v73, 0
    %v144 = vsel %vm97, %v74, 0
    %v147 = vsel %vm97, %v75, 0
    %v150 = vsel %vm97, %v76, 0
    %v153 = vsel %vm97, %v77, 0
    %v156 = vsel %vm97, %v78, 0
    %v159 = vsel %vm97, %v79, 0
    %v162 = vsel %vm97, %v80, 0
    %v165 = vsel %vm97, %v81, 0
    %v168 = vsel %vm97, %v82, 0
    %v171 = vsel %vm97, %v83, 0
    %v174 = vsel %vm97, %v84, 0
    %v177 = vsel %vm97, %v85, 0
    %v180 = vsel %vm97, %v86, 0
    %v183 = vsel %vm97, %v87, 0
    %v186 = vsel %vm97, %v88, 0
    %v189 = vsel %vm97, %v89, 0
    %v192 = vsel %vm97, %v90, 0
    %194 = vmatpush.msra.mxu0 0.0
    %195 = vmatpush.msra.mxu0 0.0
    %196 = vmatpush.msra.mxu0 0.0
    %197 = vmatpush.msra.mxu0 0.0
    %198 = vmatpush.msra.mxu0 0.0
    %199 = vmatpush.msra.mxu0 0.0
    %200 = vmatpush.msra.mxu0 0.0
    %201 = vmatpush.msra.mxu0 0.0
    %202 = vmatpush.msra.mxu0 0.0
    %203 = vmatpush.msra.mxu0 0.0
    %204 = vmatpush.msra.mxu0 0.0
    %205 = vmatpush.msra.mxu0 0.0
    %206 = vmatpush.msra.mxu0 0.0
    %207 = vmatpush.msra.mxu0 0.0
    %208 = vmatpush.msra.mxu0 %v92
    %209 = vmatpush.msra.mxu0 %v91
    %210 = vmatmul.f32.gmra.mxu0 %v99
    %v211 = vpop.f32.mrf.mxu0
    %v212 = vadd.f32 %v95, %v211
    %213 = vmatmul.f32.gmra.mxu0 %v102
    %v214 = vpop.f32.mrf.mxu0
    %v215 = vadd.f32 %v95, %v214
    %216 = vmatmul.f32.gmra.mxu0 %v105
    %v217 = vpop.f32.mrf.mxu0
    %v218 = vadd.f32 %v95, %v217
    %219 = vmatmul.f32.gmra.mxu0 %v108
    %v220 = vpop.f32.mrf.mxu0
    %v221 = vadd.f32 %v95, %v220
    %222 = vmatmul.f32.gmra.mxu0 %v111
    %v223 = vpop.f32.mrf.mxu0
    %v224 = vadd.f32 %v95, %v223
    %225 = vmatmul.f32.gmra.mxu0 %v114
    %v226 = vpop.f32.mrf.mxu0
    %v227 = vadd.f32 %v95, %v226
    %228 = vmatmul.f32.gmra.mxu0 %v117
    %v229 = vpop.f32.mrf.mxu0
    %v230 = vadd.f32 %v95, %v229
    %231 = vmatmul.f32.gmra.mxu0 %v120
    %v232 = vpop.f32.mrf.mxu0
    %v233 = vadd.f32 %v95, %v232
    %234 = vmatmul.f32.gmra.mxu0 %v123
    %v235 = vpop.f32.mrf.mxu0
    %v236 = vadd.f32 %v95, %v235
    %237 = vmatmul.f32.gmra.mxu0 %v126
    %v238 = vpop.f32.mrf.mxu0
    %v239 = vadd.f32 %v95, %v238
    %240 = vmatmul.f32.gmra.mxu0 %v129
    %v241 = vpop.f32.mrf.mxu0
    %v242 = vadd.f32 %v95, %v241
    %243 = vmatmul.f32.gmra.mxu0 %v132
    %v244 = vpop.f32.mrf.mxu0
    %v245 = vadd.f32 %v95, %v244
    %246 = vmatmul.f32.gmra.mxu0 %v135
    %v247 = vpop.f32.mrf.mxu0
    %v248 = vadd.f32 %v95, %v247
    %249 = vmatmul.f32.gmra.mxu0 %v138
    %v250 = vpop.f32.mrf.mxu0
    %v251 = vadd.f32 %v95, %v250
    %252 = vmatmul.f32.gmra.mxu0 %v141
    %v253 = vpop.f32.mrf.mxu0
    %v254 = vadd.f32 %v95, %v253
    %255 = vmatmul.f32.gmra.mxu0 %v144
    %v256 = vpop.f32.mrf.mxu0
    %v257 = vadd.f32 %v95, %v256
    %258 = vmatmul.f32.gmra.mxu0 %v147
    %v259 = vpop.f32.mrf.mxu0
    %v260 = vadd.f32 %v95, %v259
    %261 = vmatmul.f32.gmra.mxu0 %v150
    %v262 = vpop.f32.mrf.mxu0
    %v263 = vadd.f32 %v95, %v262
    %264 = vmatmul.f32.gmra.mxu0 %v153
    %v265 = vpop.f32.mrf.mxu0
    %v266 = vadd.f32 %v95, %v265
    %267 = vmatmul.f32.gmra.mxu0 %v156
    %v268 = vpop.f32.mrf.mxu0
    %v269 = vadd.f32 %v95, %v268
    %270 = vmatmul.f32.gmra.mxu0 %v159
    %v271 = vpop.f32.mrf.mxu0
    %v272 = vadd.f32 %v95, %v271
    %273 = vmatmul.f32.gmra.mxu0 %v162
    %v274 = vpop.f32.mrf.mxu0
    %v275 = vadd.f32 %v95, %v274
    %276 = vmatmul.f32.gmra.mxu0 %v165
    %v277 = vpop.f32.mrf.mxu0
    %v278 = vadd.f32 %v95, %v277
    %279 = vmatmul.f32.gmra.mxu0 %v168
    %v280 = vpop.f32.mrf.mxu0
    %v281 = vadd.f32 %v95, %v280
    %282 = vmatmul.f32.gmra.mxu0 %v171
    %v283 = vpop.f32.mrf.mxu0
    %v284 = vadd.f32 %v95, %v283
    %285 = vmatmul.f32.gmra.mxu0 %v174
    %v286 = vpop.f32.mrf.mxu0
    %v287 = vadd.f32 %v95, %v286
    %288 = vmatmul.f32.gmra.mxu0 %v177
    %v289 = vpop.f32.mrf.mxu0
    %v290 = vadd.f32 %v95, %v289
    %291 = vmatmul.f32.gmra.mxu0 %v180
    %v292 = vpop.f32.mrf.mxu0
    %v293 = vadd.f32 %v95, %v292
    %294 = vmatmul.f32.gmra.mxu0 %v183
    %v295 = vpop.f32.mrf.mxu0
    %v296 = vadd.f32 %v95, %v295
    %297 = vmatmul.f32.gmra.mxu0 %v186
    %v298 = vpop.f32.mrf.mxu0
    %v299 = vadd.f32 %v95, %v298
    %300 = vmatmul.f32.gmra.mxu0 %v189
    %v301 = vpop.f32.mrf.mxu0
    %v302 = vadd.f32 %v95, %v301
    %303 = vmatmul.f32.gmra.mxu0 %v192
    %v304 = vpop.f32.mrf.mxu0
    %v305 = vadd.f32 %v95, %v304
    %306 = vdwg.mxu0
    %v307 = vmax.f32 %v212, 0.0
    %v308 = vmax.f32 %v215, 0.0
    %v309 = vmax.f32 %v218, 0.0
    %v310 = vmax.f32 %v221, 0.0
    %v311 = vmax.f32 %v224, 0.0
    %v312 = vmax.f32 %v227, 0.0
    %v313 = vmax.f32 %v230, 0.0
    %v314 = vmax.f32 %v233, 0.0
    %v315 = vmax.f32 %v236, 0.0
    %v316 = vmax.f32 %v239, 0.0
    %v317 = vmax.f32 %v242, 0.0
    %v318 = vmax.f32 %v245, 0.0
    %v319 = vmax.f32 %v248, 0.0
    %v320 = vmax.f32 %v251, 0.0
    %v321 = vmax.f32 %v254, 0.0
    %v322 = vmax.f32 %v257, 0.0
    %v323 = vmax.f32 %v260, 0.0
    %v324 = vmax.f32 %v263, 0.0
    %v325 = vmax.f32 %v266, 0.0
    %v326 = vmax.f32 %v269, 0.0
    %v327 = vmax.f32 %v272, 0.0
    %v328 = vmax.f32 %v275, 0.0
    %v329 = vmax.f32 %v278, 0.0
    %v330 = vmax.f32 %v281, 0.0
    %v331 = vmax.f32 %v284, 0.0
    %v332 = vmax.f32 %v287, 0.0
    %v333 = vmax.f32 %v290, 0.0
    %v334 = vmax.f32 %v293, 0.0
    %v335 = vmax.f32 %v296, 0.0
    %v336 = vmax.f32 %v299, 0.0
    %v337 = vmax.f32 %v302, 0.0
    %v338 = vmax.f32 %v305, 0.0
    %v339 = vld [vmem:[#allocation2] sm:$0xff]
    %v340 = vld [vmem:[#allocation2 + $0x8] sm:$0xff]
    %v341 = vld [vmem:[#allocation2 + $0x10] sm:$0xff]
    %v342 = vld [vmem:[#allocation2 + $0x18] sm:$0xff]
    %v343 = vld [vmem:[#allocation2 + $0x20] sm:$0xff]
    %v344 = vld [vmem:[#allocation2 + $0x28] sm:$0xff]
    %v345 = vld [vmem:[#allocation2 + $0x30] sm:$0xff]
    %v346 = vld [vmem:[#allocation2 + $0x38] sm:$0xff]
    %v347 = vld [vmem:[#allocation2 + $0x40] sm:$0xff]
    %v348 = vld [vmem:[#allocation2 + $0x48] sm:$0xff]
    %v349 = vld [vmem:[#allocation2 + $0x50] sm:$0xff]
    %v350 = vld [vmem:[#allocation2 + $0x58] sm:$0xff]
    %v351 = vld [vmem:[#allocation2 + $0x60] sm:$0xff]
    %v352 = vld [vmem:[#allocation2 + $0x68] sm:$0xff]
    %v353 = vld [vmem:[#allocation2 + $0x70] sm:$0xff]
    %v354 = vld [vmem:[#allocation2 + $0x78] sm:$0xff]
    %v355 = vld [vmem:[%s4] sm:$0x1]
    %v357 = vperm.slane %v355, 0
    %359 = vmatpush.msra.mxu0 %v354
    %360 = vmatpush.msra.mxu0 %v353
    %361 = vmatpush.msra.mxu0 %v352
    %362 = vmatpush.msra.mxu0 %v351
    %363 = vmatpush.msra.mxu0 %v350
    %364 = vmatpush.msra.mxu0 %v349
    %365 = vmatpush.msra.mxu0 %v348
    %366 = vmatpush.msra.mxu0 %v347
    %367 = vmatpush.msra.mxu0 %v346
    %368 = vmatpush.msra.mxu0 %v345
    %369 = vmatpush.msra.mxu0 %v344
    %370 = vmatpush.msra.mxu0 %v343
    %371 = vmatpush.msra.mxu0 %v342
    %372 = vmatpush.msra.mxu0 %v341
    %373 = vmatpush.msra.mxu0 %v340
    %374 = vmatpush.msra.mxu0 %v339
    %375 = vmatmul.f32.gmra.mxu0 %v307
    %v376 = vpop.f32.mrf.mxu0
    %v377 = vadd.f32 %v357, %v376
    %378 = vmatmul.f32.gmra.mxu0 %v308
    %v379 = vpop.f32.mrf.mxu0
    %v380 = vadd.f32 %v357, %v379
    %381 = vmatmul.f32.gmra.mxu0 %v309
    %v382 = vpop.f32.mrf.mxu0
    %v383 = vadd.f32 %v357, %v382
    %384 = vmatmul.f32.gmra.mxu0 %v310
    %v385 = vpop.f32.mrf.mxu0
    %v386 = vadd.f32 %v357, %v385
    %387 = vmatmul.f32.gmra.mxu0 %v311
    %v388 = vpop.f32.mrf.mxu0
    %v389 = vadd.f32 %v357, %v388
    %390 = vmatmul.f32.gmra.mxu0 %v312
    %v391 = vpop.f32.mrf.mxu0
    %v392 = vadd.f32 %v357, %v391
    %393 = vmatmul.f32.gmra.mxu0 %v313
    %v394 = vpop.f32.mrf.mxu0
    %v395 = vadd.f32 %v357, %v394
    %396 = vmatmul.f32.gmra.mxu0 %v314
    %v397 = vpop.f32.mrf.mxu0
    %v398 = vadd.f32 %v357, %v397
    %399 = vmatmul.f32.gmra.mxu0 %v315
    %v400 = vpop.f32.mrf.mxu0
    %v401 = vadd.f32 %v357, %v400
    %402 = vmatmul.f32.gmra.mxu0 %v316
    %v403 = vpop.f32.mrf.mxu0
    %v404 = vadd.f32 %v357, %v403
    %405 = vmatmul.f32.gmra.mxu0 %v317
    %v406 = vpop.f32.mrf.mxu0
    %v407 = vadd.f32 %v357, %v406
    %408 = vmatmul.f32.gmra.mxu0 %v318
    %v409 = vpop.f32.mrf.mxu0
    %v410 = vadd.f32 %v357, %v409
    %411 = vmatmul.f32.gmra.mxu0 %v319
    %v412 = vpop.f32.mrf.mxu0
    %v413 = vadd.f32 %v357, %v412
    %414 = vmatmul.f32.gmra.mxu0 %v320
    %v415 = vpop.f32.mrf.mxu0
    %v416 = vadd.f32 %v357, %v415
    %417 = vmatmul.f32.gmra.mxu0 %v321
    %v418 = vpop.f32.mrf.mxu0
    %v419 = vadd.f32 %v357, %v418
    %420 = vmatmul.f32.gmra.mxu0 %v322
    %v421 = vpop.f32.mrf.mxu0
    %v422 = vadd.f32 %v357, %v421
    %423 = vmatmul.f32.gmra.mxu0 %v323
    %v424 = vpop.f32.mrf.mxu0
    %v425 = vadd.f32 %v357, %v424
    %426 = vmatmul.f32.gmra.mxu0 %v324
    %v427 = vpop.f32.mrf.mxu0
    %v428 = vadd.f32 %v357, %v427
    %429 = vmatmul.f32.gmra.mxu0 %v325
    %v430 = vpop.f32.mrf.mxu0
    %v431 = vadd.f32 %v357, %v430
    %432 = vmatmul.f32.gmra.mxu0 %v326
    %v433 = vpop.f32.mrf.mxu0
    %v434 = vadd.f32 %v357, %v433
    %435 = vmatmul.f32.gmra.mxu0 %v327
    %v436 = vpop.f32.mrf.mxu0
    %v437 = vadd.f32 %v357, %v436
    %438 = vmatmul.f32.gmra.mxu0 %v328
    %v439 = vpop.f32.mrf.mxu0
    %v440 = vadd.f32 %v357, %v439
    %441 = vmatmul.f32.gmra.mxu0 %v329
    %v442 = vpop.f32.mrf.mxu0
    %v443 = vadd.f32 %v357, %v442
    %444 = vmatmul.f32.gmra.mxu0 %v330
    %v445 = vpop.f32.mrf.mxu0
    %v446 = vadd.f32 %v357, %v445
    %447 = vmatmul.f32.gmra.mxu0 %v331
    %v448 = vpop.f32.mrf.mxu0
    %v449 = vadd.f32 %v357, %v448
    %450 = vmatmul.f32.gmra.mxu0 %v332
    %v451 = vpop.f32.mrf.mxu0
    %v452 = vadd.f32 %v357, %v451
    %453 = vmatmul.f32.gmra.mxu0 %v333
    %v454 = vpop.f32.mrf.mxu0
    %v455 = vadd.f32 %v357, %v454
    %456 = vmatmul.f32.gmra.mxu0 %v334
    %v457 = vpop.f32.mrf.mxu0
    %v458 = vadd.f32 %v357, %v457
    %459 = vmatmul.f32.gmra.mxu0 %v335
    %v460 = vpop.f32.mrf.mxu0
    %v461 = vadd.f32 %v357, %v460
    %462 = vmatmul.f32.gmra.mxu0 %v336
    %v463 = vpop.f32.mrf.mxu0
    %v464 = vadd.f32 %v357, %v463
    %465 = vmatmul.f32.gmra.mxu0 %v337
    %v466 = vpop.f32.mrf.mxu0
    %v467 = vadd.f32 %v357, %v466
    %468 = vmatmul.f32.gmra.mxu0 %v338
    %v469 = vpop.f32.mrf.mxu0
    %v470 = vadd.f32 %v357, %v469
    %471 = vdwg.mxu0
    %v472 = vmax.f32 %v377, 0.0
    %v473 = vmax.f32 %v380, 0.0
    %v474 = vmax.f32 %v383, 0.0
    %v475 = vmax.f32 %v386, 0.0
    %v476 = vmax.f32 %v389, 0.0
    %v477 = vmax.f32 %v392, 0.0
    %v478 = vmax.f32 %v395, 0.0
    %v479 = vmax.f32 %v398, 0.0
    %v480 = vmax.f32 %v401, 0.0
    %v481 = vmax.f32 %v404, 0.0
    %v482 = vmax.f32 %v407, 0.0
    %v483 = vmax.f32 %v410, 0.0
    %v484 = vmax.f32 %v413, 0.0
    %v485 = vmax.f32 %v416, 0.0
    %v486 = vmax.f32 %v419, 0.0
    %v487 = vmax.f32 %v422, 0.0
    %v488 = vmax.f32 %v425, 0.0
    %v489 = vmax.f32 %v428, 0.0
    %v490 = vmax.f32 %v431, 0.0
    %v491 = vmax.f32 %v434, 0.0
    %v492 = vmax.f32 %v437, 0.0
    %v493 = vmax.f32 %v440, 0.0
    %v494 = vmax.f32 %v443, 0.0
    %v495 = vmax.f32 %v446, 0.0
    %v496 = vmax.f32 %v449, 0.0
    %v497 = vmax.f32 %v452, 0.0
    %v498 = vmax.f32 %v455, 0.0
    %v499 = vmax.f32 %v458, 0.0
    %v500 = vmax.f32 %v461, 0.0
    %v501 = vmax.f32 %v464, 0.0
    %v502 = vmax.f32 %v467, 0.0
    %v503 = vmax.f32 %v470, 0.0
    %v504 = vld [vmem:[#allocation5] sm:$0xff]
    %v505 = vld [vmem:[#allocation5 + $0x8] sm:$0xff]
    %v506 = vld [vmem:[#allocation5 + $0x10] sm:$0xff]
    %v507 = vld [vmem:[#allocation5 + $0x18] sm:$0xff]
    %v508 = vld [vmem:[#allocation5 + $0x20] sm:$0xff]
    %v509 = vld [vmem:[#allocation5 + $0x28] sm:$0xff]
    %v510 = vld [vmem:[#allocation5 + $0x30] sm:$0xff]
    %v511 = vld [vmem:[#allocation5 + $0x38] sm:$0xff]
    %v512 = vld [vmem:[#allocation5 + $0x40] sm:$0xff]
    %v513 = vld [vmem:[#allocation5 + $0x48] sm:$0xff]
    %v514 = vld [vmem:[#allocation5 + $0x50] sm:$0xff]
    %v515 = vld [vmem:[#allocation5 + $0x58] sm:$0xff]
    %v516 = vld [vmem:[#allocation5 + $0x60] sm:$0xff]
    %v517 = vld [vmem:[#allocation5 + $0x68] sm:$0xff]
    %v518 = vld [vmem:[#allocation5 + $0x70] sm:$0xff]
    %v519 = vld [vmem:[#allocation5 + $0x78] sm:$0xff]
    %v520 = vld [vmem:[%s6] sm:$0x1]
    %v522 = vperm.slane %v520, 0
    %524 = vmatpush.msra.mxu0 %v519
    %525 = vmatpush.msra.mxu0 %v518
    %526 = vmatpush.msra.mxu0 %v517
    %527 = vmatpush.msra.mxu0 %v516
    %528 = vmatpush.msra.mxu0 %v515
    %529 = vmatpush.msra.mxu0 %v514
    %530 = vmatpush.msra.mxu0 %v513
    %531 = vmatpush.msra.mxu0 %v512
    %532 = vmatpush.msra.mxu0 %v511
    %533 = vmatpush.msra.mxu0 %v510
    %534 = vmatpush.msra.mxu0 %v509
    %535 = vmatpush.msra.mxu0 %v508
    %536 = vmatpush.msra.mxu0 %v507
    %537 = vmatpush.msra.mxu0 %v506
    %538 = vmatpush.msra.mxu0 %v505
    %539 = vmatpush.msra.mxu0 %v504
    %540 = vmatmul.f32.gmra.mxu0 %v472
    %v541 = vpop.f32.mrf.mxu0
    %v542 = vadd.f32 %v522, %v541
    %543 = vmatmul.f32.gmra.mxu0 %v473
    %v544 = vpop.f32.mrf.mxu0
    %v545 = vadd.f32 %v522, %v544
    %546 = vmatmul.f32.gmra.mxu0 %v474
    %v547 = vpop.f32.mrf.mxu0
    %v548 = vadd.f32 %v522, %v547
    %549 = vmatmul.f32.gmra.mxu0 %v475
    %v550 = vpop.f32.mrf.mxu0
    %v551 = vadd.f32 %v522, %v550
    %552 = vmatmul.f32.gmra.mxu0 %v476
    %v553 = vpop.f32.mrf.mxu0
    %v554 = vadd.f32 %v522, %v553
    %555 = vmatmul.f32.gmra.mxu0 %v477
    %v556 = vpop.f32.mrf.mxu0
    %v557 = vadd.f32 %v522, %v556
    %558 = vmatmul.f32.gmra.mxu0 %v478
    %v559 = vpop.f32.mrf.mxu0
    %v560 = vadd.f32 %v522, %v559
    %561 = vmatmul.f32.gmra.mxu0 %v479
    %v562 = vpop.f32.mrf.mxu0
    %v563 = vadd.f32 %v522, %v562
    %564 = vmatmul.f32.gmra.mxu0 %v480
    %v565 = vpop.f32.mrf.mxu0
    %v566 = vadd.f32 %v522, %v565
    %567 = vmatmul.f32.gmra.mxu0 %v481
    %v568 = vpop.f32.mrf.mxu0
    %v569 = vadd.f32 %v522, %v568
    %570 = vmatmul.f32.gmra.mxu0 %v482
    %v571 = vpop.f32.mrf.mxu0
    %v572 = vadd.f32 %v522, %v571
    %573 = vmatmul.f32.gmra.mxu0 %v483
    %v574 = vpop.f32.mrf.mxu0
    %v575 = vadd.f32 %v522, %v574
    %576 = vmatmul.f32.gmra.mxu0 %v484
    %v577 = vpop.f32.mrf.mxu0
    %v578 = vadd.f32 %v522, %v577
    %579 = vmatmul.f32.gmra.mxu0 %v485
    %v580 = vpop.f32.mrf.mxu0
    %v581 = vadd.f32 %v522, %v580
    %582 = vmatmul.f32.gmra.mxu0 %v486
    %v583 = vpop.f32.mrf.mxu0
    %v584 = vadd.f32 %v522, %v583
    %585 = vmatmul.f32.gmra.mxu0 %v487
    %v586 = vpop.f32.mrf.mxu0
    %v587 = vadd.f32 %v522, %v586
    %588 = vmatmul.f32.gmra.mxu0 %v488
    %v589 = vpop.f32.mrf.mxu0
    %v590 = vadd.f32 %v522, %v589
    %591 = vmatmul.f32.gmra.mxu0 %v489
    %v592 = vpop.f32.mrf.mxu0
    %v593 = vadd.f32 %v522, %v592
    %594 = vmatmul.f32.gmra.mxu0 %v490
    %v595 = vpop.f32.mrf.mxu0
    %v596 = vadd.f32 %v522, %v595
    %597 = vmatmul.f32.gmra.mxu0 %v491
    %v598 = vpop.f32.mrf.mxu0
    %v599 = vadd.f32 %v522, %v598
    %600 = vmatmul.f32.gmra.mxu0 %v492
    %v601 = vpop.f32.mrf.mxu0
    %v602 = vadd.f32 %v522, %v601
    %603 = vmatmul.f32.gmra.mxu0 %v493
    %v604 = vpop.f32.mrf.mxu0
    %v605 = vadd.f32 %v522, %v604
    %606 = vmatmul.f32.gmra.mxu0 %v494
    %v607 = vpop.f32.mrf.mxu0
    %v608 = vadd.f32 %v522, %v607
    %609 = vmatmul.f32.gmra.mxu0 %v495
    %v610 = vpop.f32.mrf.mxu0
    %v611 = vadd.f32 %v522, %v610
    %612 = vmatmul.f32.gmra.mxu0 %v496
    %v613 = vpop.f32.mrf.mxu0
    %v614 = vadd.f32 %v522, %v613
    %615 = vmatmul.f32.gmra.mxu0 %v497
    %v616 = vpop.f32.mrf.mxu0
    %v617 = vadd.f32 %v522, %v616
    %618 = vmatmul.f32.gmra.mxu0 %v498
    %v619 = vpop.f32.mrf.mxu0
    %v620 = vadd.f32 %v522, %v619
    %621 = vmatmul.f32.gmra.mxu0 %v499
    %v622 = vpop.f32.mrf.mxu0
    %v623 = vadd.f32 %v522, %v622
    %624 = vmatmul.f32.gmra.mxu0 %v500
    %v625 = vpop.f32.mrf.mxu0
    %v626 = vadd.f32 %v522, %v625
    %627 = vmatmul.f32.gmra.mxu0 %v501
    %v628 = vpop.f32.mrf.mxu0
    %v629 = vadd.f32 %v522, %v628
    %630 = vmatmul.f32.gmra.mxu0 %v502
    %v631 = vpop.f32.mrf.mxu0
    %v632 = vadd.f32 %v522, %v631
    %633 = vmatmul.f32.gmra.mxu0 %v503
    %v634 = vpop.f32.mrf.mxu0
    %v635 = vadd.f32 %v522, %v634
    %636 = vdwg.mxu0
    %v637 = vadd.f32 %v542, %v307
    %v638 = vadd.f32 %v545, %v308
    %v639 = vadd.f32 %v548, %v309
    %v640 = vadd.f32 %v551, %v310
    %v641 = vadd.f32 %v554, %v311
    %v642 = vadd.f32 %v557, %v312
    %v643 = vadd.f32 %v560, %v313
    %v644 = vadd.f32 %v563, %v314
    %v645 = vadd.f32 %v566, %v315
    %v646 = vadd.f32 %v569, %v316
    %v647 = vadd.f32 %v572, %v317
    %v648 = vadd.f32 %v575, %v318
    %v649 = vadd.f32 %v578, %v319
    %v650 = vadd.f32 %v581, %v320
    %v651 = vadd.f32 %v584, %v321
    %v652 = vadd.f32 %v587, %v322
    %v653 = vadd.f32 %v590, %v323
    %v654 = vadd.f32 %v593, %v324
    %v655 = vadd.f32 %v596, %v325
    %v656 = vadd.f32 %v599, %v326
    %v657 = vadd.f32 %v602, %v327
    %v658 = vadd.f32 %v605, %v328
    %v659 = vadd.f32 %v608, %v329
    %v660 = vadd.f32 %v611, %v330
    %v661 = vadd.f32 %v614, %v331
    %v662 = vadd.f32 %v617, %v332
    %v663 = vadd.f32 %v620, %v333
    %v664 = vadd.f32 %v623, %v334
    %v665 = vadd.f32 %v626, %v335
    %v666 = vadd.f32 %v629, %v336
    %v667 = vadd.f32 %v632, %v337
    %v668 = vadd.f32 %v635, %v338
    %v669 = vmax.f32 %v637, 0.0
    %v670 = vmax.f32 %v638, 0.0
    %v671 = vmax.f32 %v639, 0.0
    %v672 = vmax.f32 %v640, 0.0
    %v673 = vmax.f32 %v641, 0.0
    %v674 = vmax.f32 %v642, 0.0
    %v675 = vmax.f32 %v643, 0.0
    %v676 = vmax.f32 %v644, 0.0
    %v677 = vmax.f32 %v645, 0.0
    %v678 = vmax.f32 %v646, 0.0
    %v679 = vmax.f32 %v647, 0.0
    %v680 = vmax.f32 %v648, 0.0
    %v681 = vmax.f32 %v649, 0.0
    %v682 = vmax.f32 %v650, 0.0
    %v683 = vmax.f32 %v651, 0.0
    %v684 = vmax.f32 %v652, 0.0
    %v685 = vmax.f32 %v653, 0.0
    %v686 = vmax.f32 %v654, 0.0
    %v687 = vmax.f32 %v655, 0.0
    %v688 = vmax.f32 %v656, 0.0
    %v689 = vmax.f32 %v657, 0.0
    %v690 = vmax.f32 %v658, 0.0
    %v691 = vmax.f32 %v659, 0.0
    %v692 = vmax.f32 %v660, 0.0
    %v693 = vmax.f32 %v661, 0.0
    %v694 = vmax.f32 %v662, 0.0
    %v695 = vmax.f32 %v663, 0.0
    %v696 = vmax.f32 %v664, 0.0
    %v697 = vmax.f32 %v665, 0.0
    %v698 = vmax.f32 %v666, 0.0
    %v699 = vmax.f32 %v667, 0.0
    %v700 = vmax.f32 %v668, 0.0
    %s701 = scalar_lea.vmem [#allocation2], 128
    %v702 = vld [vmem:[%s701] sm:$0xff]
    %v703 = vld [vmem:[%s701 + $0x8] sm:$0xff]
    %v704 = vld [vmem:[%s701 + $0x10] sm:$0xff]
    %v705 = vld [vmem:[%s701 + $0x18] sm:$0xff]
    %v706 = vld [vmem:[%s701 + $0x20] sm:$0xff]
    %v707 = vld [vmem:[%s701 + $0x28] sm:$0xff]
    %v708 = vld [vmem:[%s701 + $0x30] sm:$0xff]
    %v709 = vld [vmem:[%s701 + $0x38] sm:$0xff]
    %v710 = vld [vmem:[%s701 + $0x40] sm:$0xff]
    %v711 = vld [vmem:[%s701 + $0x48] sm:$0xff]
    %v712 = vld [vmem:[%s701 + $0x50] sm:$0xff]
    %v713 = vld [vmem:[%s701 + $0x58] sm:$0xff]
    %v714 = vld [vmem:[%s701 + $0x60] sm:$0xff]
    %v715 = vld [vmem:[%s701 + $0x68] sm:$0xff]
    %v716 = vld [vmem:[%s701 + $0x70] sm:$0xff]
    %v717 = vld [vmem:[%s701 + $0x78] sm:$0xff]
    %s718 = scalar_lea.vmem %s4, 1
    %v719 = vld [vmem:[%s718] sm:$0x1]
    %v721 = vperm.slane %v719, 0
    %723 = vmatpush.msra.mxu0 %v717
    %724 = vmatpush.msra.mxu0 %v716
    %725 = vmatpush.msra.mxu0 %v715
    %726 = vmatpush.msra.mxu0 %v714
    %727 = vmatpush.msra.mxu0 %v713
    %728 = vmatpush.msra.mxu0 %v712
    %729 = vmatpush.msra.mxu0 %v711
    %730 = vmatpush.msra.mxu0 %v710
    %731 = vmatpush.msra.mxu0 %v709
    %732 = vmatpush.msra.mxu0 %v708
    %733 = vmatpush.msra.mxu0 %v707
    %734 = vmatpush.msra.mxu0 %v706
    %735 = vmatpush.msra.mxu0 %v705
    %736 = vmatpush.msra.mxu0 %v704
    %737 = vmatpush.msra.mxu0 %v703
    %738 = vmatpush.msra.mxu0 %v702
    %739 = vmatmul.f32.gmra.mxu0 %v669
    %v740 = vpop.f32.mrf.mxu0
    %v741 = vadd.f32 %v721, %v740
    %742 = vmatmul.f32.gmra.mxu0 %v670
    %v743 = vpop.f32.mrf.mxu0
    %v744 = vadd.f32 %v721, %v743
    %745 = vmatmul.f32.gmra.mxu0 %v671
    %v746 = vpop.f32.mrf.mxu0
    %v747 = vadd.f32 %v721, %v746
    %748 = vmatmul.f32.gmra.mxu0 %v672
    %v749 = vpop.f32.mrf.mxu0
    %v750 = vadd.f32 %v721, %v749
    %751 = vmatmul.f32.gmra.mxu0 %v673
    %v752 = vpop.f32.mrf.mxu0
    %v753 = vadd.f32 %v721, %v752
    %754 = vmatmul.f32.gmra.mxu0 %v674
    %v755 = vpop.f32.mrf.mxu0
    %v756 = vadd.f32 %v721, %v755
    %757 = vmatmul.f32.gmra.mxu0 %v675
    %v758 = vpop.f32.mrf.mxu0
    %v759 = vadd.f32 %v721, %v758
    %760 = vmatmul.f32.gmra.mxu0 %v676
    %v761 = vpop.f32.mrf.mxu0
    %v762 = vadd.f32 %v721, %v761
    %763 = vmatmul.f32.gmra.mxu0 %v677
    %v764 = vpop.f32.mrf.mxu0
    %v765 = vadd.f32 %v721, %v764
    %766 = vmatmul.f32.gmra.mxu0 %v678
    %v767 = vpop.f32.mrf.mxu0
    %v768 = vadd.f32 %v721, %v767
    %769 = vmatmul.f32.gmra.mxu0 %v679
    %v770 = vpop.f32.mrf.mxu0
    %v771 = vadd.f32 %v721, %v770
    %772 = vmatmul.f32.gmra.mxu0 %v680
    %v773 = vpop.f32.mrf.mxu0
    %v774 = vadd.f32 %v721, %v773
    %775 = vmatmul.f32.gmra.mxu0 %v681
    %v776 = vpop.f32.mrf.mxu0
    %v777 = vadd.f32 %v721, %v776
    %778 = vmatmul.f32.gmra.mxu0 %v682
    %v779 = vpop.f32.mrf.mxu0
    %v780 = vadd.f32 %v721, %v779
    %781 = vmatmul.f32.gmra.mxu0 %v683
    %v782 = vpop.f32.mrf.mxu0
    %v783 = vadd.f32 %v721, %v782
    %784 = vmatmul.f32.gmra.mxu0 %v684
    %v785 = vpop.f32.mrf.mxu0
    %v786 = vadd.f32 %v721, %v785
    %787 = vmatmul.f32.gmra.mxu0 %v685
    %v788 = vpop.f32.mrf.mxu0
    %v789 = vadd.f32 %v721, %v788
    %790 = vmatmul.f32.gmra.mxu0 %v686
    %v791 = vpop.f32.mrf.mxu0
    %v792 = vadd.f32 %v721, %v791
    %793 = vmatmul.f32.gmra.mxu0 %v687
    %v794 = vpop.f32.mrf.mxu0
    %v795 = vadd.f32 %v721, %v794
    %796 = vmatmul.f32.gmra.mxu0 %v688
    %v797 = vpop.f32.mrf.mxu0
    %v798 = vadd.f32 %v721, %v797
    %799 = vmatmul.f32.gmra.mxu0 %v689
    %v800 = vpop.f32.mrf.mxu0
    %v801 = vadd.f32 %v721, %v800
    %802 = vmatmul.f32.gmra.mxu0 %v690
    %v803 = vpop.f32.mrf.mxu0
    %v804 = vadd.f32 %v721, %v803
    %805 = vmatmul.f32.gmra.mxu0 %v691
    %v806 = vpop.f32.mrf.mxu0
    %v807 = vadd.f32 %v721, %v806
    %808 = vmatmul.f32.gmra.mxu0 %v692
    %v809 = vpop.f32.mrf.mxu0
    %v810 = vadd.f32 %v721, %v809
    %811 = vmatmul.f32.gmra.mxu0 %v693
    %v812 = vpop.f32.mrf.mxu0
    %v813 = vadd.f32 %v721, %v812
    %814 = vmatmul.f32.gmra.mxu0 %v694
    %v815 = vpop.f32.mrf.mxu0
    %v816 = vadd.f32 %v721, %v815
    %817 = vmatmul.f32.gmra.mxu0 %v695
    %v818 = vpop.f32.mrf.mxu0
    %v819 = vadd.f32 %v721, %v818
    %820 = vmatmul.f32.gmra.mxu0 %v696
    %v821 = vpop.f32.mrf.mxu0
    %v822 = vadd.f32 %v721, %v821
    %823 = vmatmul.f32.gmra.mxu0 %v697
    %v824 = vpop.f32.mrf.mxu0
    %v825 = vadd.f32 %v721, %v824
    %826 = vmatmul.f32.gmra.mxu0 %v698
    %v827 = vpop.f32.mrf.mxu0
    %v828 = vadd.f32 %v721, %v827
    %829 = vmatmul.f32.gmra.mxu0 %v699
    %v830 = vpop.f32.mrf.mxu0
    %v831 = vadd.f32 %v721, %v830
    %832 = vmatmul.f32.gmra.mxu0 %v700
    %v833 = vpop.f32.mrf.mxu0
    %v834 = vadd.f32 %v721, %v833
    %835 = vdwg.mxu0
    %v836 = vmax.f32 %v741, 0.0
    %v837 = vmax.f32 %v744, 0.0
    %v838 = vmax.f32 %v747, 0.0
    %v839 = vmax.f32 %v750, 0.0
    %v840 = vmax.f32 %v753, 0.0
    %v841 = vmax.f32 %v756, 0.0
    %v842 = vmax.f32 %v759, 0.0
    %v843 = vmax.f32 %v762, 0.0
    %v844 = vmax.f32 %v765, 0.0
    %v845 = vmax.f32 %v768, 0.0
    %v846 = vmax.f32 %v771, 0.0
    %v847 = vmax.f32 %v774, 0.0
    %v848 = vmax.f32 %v777, 0.0
    %v849 = vmax.f32 %v780, 0.0
    %v850 = vmax.f32 %v783, 0.0
    %v851 = vmax.f32 %v786, 0.0
    %v852 = vmax.f32 %v789, 0.0
    %v853 = vmax.f32 %v792, 0.0
    %v854 = vmax.f32 %v795, 0.0
    %v855 = vmax.f32 %v798, 0.0
    %v856 = vmax.f32 %v801, 0.0
    %v857 = vmax.f32 %v804, 0.0
    %v858 = vmax.f32 %v807, 0.0
    %v859 = vmax.f32 %v810, 0.0
    %v860 = vmax.f32 %v813, 0.0
    %v861 = vmax.f32 %v816, 0.0
    %v862 = vmax.f32 %v819, 0.0
    %v863 = vmax.f32 %v822, 0.0
    %v864 = vmax.f32 %v825, 0.0
    %v865 = vmax.f32 %v828, 0.0
    %v866 = vmax.f32 %v831, 0.0
    %v867 = vmax.f32 %v834, 0.0
    %s868 = scalar_lea.vmem [#allocation5], 128
    %v869 = vld [vmem:[%s868] sm:$0xff]
    %v870 = vld [vmem:[%s868 + $0x8] sm:$0xff]
    %v871 = vld [vmem:[%s868 + $0x10] sm:$0xff]
    %v872 = vld [vmem:[%s868 + $0x18] sm:$0xff]
    %v873 = vld [vmem:[%s868 + $0x20] sm:$0xff]
    %v874 = vld [vmem:[%s868 + $0x28] sm:$0xff]
    %v875 = vld [vmem:[%s868 + $0x30] sm:$0xff]
    %v876 = vld [vmem:[%s868 + $0x38] sm:$0xff]
    %v877 = vld [vmem:[%s868 + $0x40] sm:$0xff]
    %v878 = vld [vmem:[%s868 + $0x48] sm:$0xff]
    %v879 = vld [vmem:[%s868 + $0x50] sm:$0xff]
    %v880 = vld [vmem:[%s868 + $0x58] sm:$0xff]
    %v881 = vld [vmem:[%s868 + $0x60] sm:$0xff]
    %v882 = vld [vmem:[%s868 + $0x68] sm:$0xff]
    %v883 = vld [vmem:[%s868 + $0x70] sm:$0xff]
    %v884 = vld [vmem:[%s868 + $0x78] sm:$0xff]
    %s885 = scalar_lea.vmem %s6, 1
    %v886 = vld [vmem:[%s885] sm:$0x1]
    %v888 = vperm.slane %v886, 0
    %890 = vmatpush.msra.mxu0 %v884
    %891 = vmatpush.msra.mxu0 %v883
    %892 = vmatpush.msra.mxu0 %v882
    %893 = vmatpush.msra.mxu0 %v881
    %894 = vmatpush.msra.mxu0 %v880
    %895 = vmatpush.msra.mxu0 %v879
    %896 = vmatpush.msra.mxu0 %v878
    %897 = vmatpush.msra.mxu0 %v877
    %898 = vmatpush.msra.mxu0 %v876
    %899 = vmatpush.msra.mxu0 %v875
    %900 = vmatpush.msra.mxu0 %v874
    %901 = vmatpush.msra.mxu0 %v873
    %902 = vmatpush.msra.mxu0 %v872
    %903 = vmatpush.msra.mxu0 %v871
    %904 = vmatpush.msra.mxu0 %v870
    %905 = vmatpush.msra.mxu0 %v869
    %906 = vmatmul.f32.gmra.mxu0 %v836
    %v907 = vpop.f32.mrf.mxu0
    %v908 = vadd.f32 %v888, %v907
    %909 = vmatmul.f32.gmra.mxu0 %v837
    %v910 = vpop.f32.mrf.mxu0
    %v911 = vadd.f32 %v888, %v910
    %912 = vmatmul.f32.gmra.mxu0 %v838
    %v913 = vpop.f32.mrf.mxu0
    %v914 = vadd.f32 %v888, %v913
    %915 = vmatmul.f32.gmra.mxu0 %v839
    %v916 = vpop.f32.mrf.mxu0
    %v917 = vadd.f32 %v888, %v916
    %918 = vmatmul.f32.gmra.mxu0 %v840
    %v919 = vpop.f32.mrf.mxu0
    %v920 = vadd.f32 %v888, %v919
    %921 = vmatmul.f32.gmra.mxu0 %v841
    %v922 = vpop.f32.mrf.mxu0
    %v923 = vadd.f32 %v888, %v922
    %924 = vmatmul.f32.gmra.mxu0 %v842
    %v925 = vpop.f32.mrf.mxu0
    %v926 = vadd.f32 %v888, %v925
    %927 = vmatmul.f32.gmra.mxu0 %v843
    %v928 = vpop.f32.mrf.mxu0
    %v929 = vadd.f32 %v888, %v928
    %930 = vmatmul.f32.gmra.mxu0 %v844
    %v931 = vpop.f32.mrf.mxu0
    %v932 = vadd.f32 %v888, %v931
    %933 = vmatmul.f32.gmra.mxu0 %v845
    %v934 = vpop.f32.mrf.mxu0
    %v935 = vadd.f32 %v888, %v934
    %936 = vmatmul.f32.gmra.mxu0 %v846
    %v937 = vpop.f32.mrf.mxu0
    %v938 = vadd.f32 %v888, %v937
    %939 = vmatmul.f32.gmra.mxu0 %v847
    %v940 = vpop.f32.mrf.mxu0
    %v941 = vadd.f32 %v888, %v940
    %942 = vmatmul.f32.gmra.mxu0 %v848
    %v943 = vpop.f32.mrf.mxu0
    %v944 = vadd.f32 %v888, %v943
    %945 = vmatmul.f32.gmra.mxu0 %v849
    %v946 = vpop.f32.mrf.mxu0
    %v947 = vadd.f32 %v888, %v946
    %948 = vmatmul.f32.gmra.mxu0 %v850
    %v949 = vpop.f32.mrf.mxu0
    %v950 = vadd.f32 %v888, %v949
    %951 = vmatmul.f32.gmra.mxu0 %v851
    %v952 = vpop.f32.mrf.mxu0
    %v953 = vadd.f32 %v888, %v952
    %954 = vmatmul.f32.gmra.mxu0 %v852
    %v955 = vpop.f32.mrf.mxu0
    %v956 = vadd.f32 %v888, %v955
    %957 = vmatmul.f32.gmra.mxu0 %v853
    %v958 = vpop.f32.mrf.mxu0
    %v959 = vadd.f32 %v888, %v958
    %960 = vmatmul.f32.gmra.mxu0 %v854
    %v961 = vpop.f32.mrf.mxu0
    %v962 = vadd.f32 %v888, %v961
    %963 = vmatmul.f32.gmra.mxu0 %v855
    %v964 = vpop.f32.mrf.mxu0
    %v965 = vadd.f32 %v888, %v964
    %966 = vmatmul.f32.gmra.mxu0 %v856
    %v967 = vpop.f32.mrf.mxu0
    %v968 = vadd.f32 %v888, %v967
    %969 = vmatmul.f32.gmra.mxu0 %v857
    %v970 = vpop.f32.mrf.mxu0
    %v971 = vadd.f32 %v888, %v970
    %972 = vmatmul.f32.gmra.mxu0 %v858
    %v973 = vpop.f32.mrf.mxu0
    %v974 = vadd.f32 %v888, %v973
    %975 = vmatmul.f32.gmra.mxu0 %v859
    %v976 = vpop.f32.mrf.mxu0
    %v977 = vadd.f32 %v888, %v976
    %978 = vmatmul.f32.gmra.mxu0 %v860
    %v979 = vpop.f32.mrf.mxu0
    %v980 = vadd.f32 %v888, %v979
    %981 = vmatmul.f32.gmra.mxu0 %v861
    %v982 = vpop.f32.mrf.mxu0
    %v983 = vadd.f32 %v888, %v982
    %984 = vmatmul.f32.gmra.mxu0 %v862
    %v985 = vpop.f32.mrf.mxu0
    %v986 = vadd.f32 %v888, %v985
    %987 = vmatmul.f32.gmra.mxu0 %v863
    %v988 = vpop.f32.mrf.mxu0
    %v989 = vadd.f32 %v888, %v988
    %990 = vmatmul.f32.gmra.mxu0 %v864
    %v991 = vpop.f32.mrf.mxu0
    %v992 = vadd.f32 %v888, %v991
    %993 = vmatmul.f32.gmra.mxu0 %v865
    %v994 = vpop.f32.mrf.mxu0
    %v995 = vadd.f32 %v888, %v994
    %996 = vmatmul.f32.gmra.mxu0 %v866
    %v997 = vpop.f32.mrf.mxu0
    %v998 = vadd.f32 %v888, %v997
    %999 = vmatmul.f32.gmra.mxu0 %v867
    %v1000 = vpop.f32.mrf.mxu0
    %v1001 = vadd.f32 %v888, %v1000
    %1002 = vdwg.mxu0
    %v1003 = vadd.f32 %v908, %v669
    %v1004 = vadd.f32 %v911, %v670
    %v1005 = vadd.f32 %v914, %v671
    %v1006 = vadd.f32 %v917, %v672
    %v1007 = vadd.f32 %v920, %v673
    %v1008 = vadd.f32 %v923, %v674
    %v1009 = vadd.f32 %v926, %v675
    %v1010 = vadd.f32 %v929, %v676
    %v1011 = vadd.f32 %v932, %v677
    %v1012 = vadd.f32 %v935, %v678
    %v1013 = vadd.f32 %v938, %v679
    %v1014 = vadd.f32 %v941, %v680
    %v1015 = vadd.f32 %v944, %v681
    %v1016 = vadd.f32 %v947, %v682
    %v1017 = vadd.f32 %v950, %v683
    %v1018 = vadd.f32 %v953, %v684
    %v1019 = vadd.f32 %v956, %v685
    %v1020 = vadd.f32 %v959, %v686
    %v1021 = vadd.f32 %v962, %v687
    %v1022 = vadd.f32 %v965, %v688
    %v1023 = vadd.f32 %v968, %v689
    %v1024 = vadd.f32 %v971, %v690
    %v1025 = vadd.f32 %v974, %v691
    %v1026 = vadd.f32 %v977, %v692
    %v1027 = vadd.f32 %v980, %v693
    %v1028 = vadd.f32 %v983, %v694
    %v1029 = vadd.f32 %v986, %v695
    %v1030 = vadd.f32 %v989, %v696
    %v1031 = vadd.f32 %v992, %v697
    %v1032 = vadd.f32 %v995, %v698
    %v1033 = vadd.f32 %v998, %v699
    %v1034 = vadd.f32 %v1001, %v700
    %v1035 = vmax.f32 %v1003, 0.0
    %v1036 = vmax.f32 %v1004, 0.0
    %v1037 = vmax.f32 %v1005, 0.0
    %v1038 = vmax.f32 %v1006, 0.0
    %v1039 = vmax.f32 %v1007, 0.0
    %v1040 = vmax.f32 %v1008, 0.0
    %v1041 = vmax.f32 %v1009, 0.0
    %v1042 = vmax.f32 %v1010, 0.0
    %v1043 = vmax.f32 %v1011, 0.0
    %v1044 = vmax.f32 %v1012, 0.0
    %v1045 = vmax.f32 %v1013, 0.0
    %v1046 = vmax.f32 %v1014, 0.0
    %v1047 = vmax.f32 %v1015, 0.0
    %v1048 = vmax.f32 %v1016, 0.0
    %v1049 = vmax.f32 %v1017, 0.0
    %v1050 = vmax.f32 %v1018, 0.0
    %v1051 = vmax.f32 %v1019, 0.0
    %v1052 = vmax.f32 %v1020, 0.0
    %v1053 = vmax.f32 %v1021, 0.0
    %v1054 = vmax.f32 %v1022, 0.0
    %v1055 = vmax.f32 %v1023, 0.0
    %v1056 = vmax.f32 %v1024, 0.0
    %v1057 = vmax.f32 %v1025, 0.0
    %v1058 = vmax.f32 %v1026, 0.0
    %v1059 = vmax.f32 %v1027, 0.0
    %v1060 = vmax.f32 %v1028, 0.0
    %v1061 = vmax.f32 %v1029, 0.0
    %v1062 = vmax.f32 %v1030, 0.0
    %v1063 = vmax.f32 %v1031, 0.0
    %v1064 = vmax.f32 %v1032, 0.0
    %v1065 = vmax.f32 %v1033, 0.0
    %v1066 = vmax.f32 %v1034, 0.0
    %s1067 = scalar_lea.vmem [#allocation2], 256
    %v1068 = vld [vmem:[%s1067] sm:$0xff]
    %v1069 = vld [vmem:[%s1067 + $0x8] sm:$0xff]
    %v1070 = vld [vmem:[%s1067 + $0x10] sm:$0xff]
    %v1071 = vld [vmem:[%s1067 + $0x18] sm:$0xff]
    %v1072 = vld [vmem:[%s1067 + $0x20] sm:$0xff]
    %v1073 = vld [vmem:[%s1067 + $0x28] sm:$0xff]
    %v1074 = vld [vmem:[%s1067 + $0x30] sm:$0xff]
    %v1075 = vld [vmem:[%s1067 + $0x38] sm:$0xff]
    %v1076 = vld [vmem:[%s1067 + $0x40] sm:$0xff]
    %v1077 = vld [vmem:[%s1067 + $0x48] sm:$0xff]
    %v1078 = vld [vmem:[%s1067 + $0x50] sm:$0xff]
    %v1079 = vld [vmem:[%s1067 + $0x58] sm:$0xff]
    %v1080 = vld [vmem:[%s1067 + $0x60] sm:$0xff]
    %v1081 = vld [vmem:[%s1067 + $0x68] sm:$0xff]
    %v1082 = vld [vmem:[%s1067 + $0x70] sm:$0xff]
    %v1083 = vld [vmem:[%s1067 + $0x78] sm:$0xff]
    %s1084 = scalar_lea.vmem %s4, 2
    %v1085 = vld [vmem:[%s1084] sm:$0x1]
    %v1087 = vperm.slane %v1085, 0
    %1089 = vmatpush.msra.mxu0 %v1083
    %1090 = vmatpush.msra.mxu0 %v1082
    %1091 = vmatpush.msra.mxu0 %v1081
    %1092 = vmatpush.msra.mxu0 %v1080
    %1093 = vmatpush.msra.mxu0 %v1079
    %1094 = vmatpush.msra.mxu0 %v1078
    %1095 = vmatpush.msra.mxu0 %v1077
    %1096 = vmatpush.msra.mxu0 %v1076
    %1097 = vmatpush.msra.mxu0 %v1075
    %1098 = vmatpush.msra.mxu0 %v1074
    %1099 = vmatpush.msra.mxu0 %v1073
    %1100 = vmatpush.msra.mxu0 %v1072
    %1101 = vmatpush.msra.mxu0 %v1071
    %1102 = vmatpush.msra.mxu0 %v1070
    %1103 = vmatpush.msra.mxu0 %v1069
    %1104 = vmatpush.msra.mxu0 %v1068
    %1105 = vmatmul.f32.gmra.mxu0 %v1035
    %v1106 = vpop.f32.mrf.mxu0
    %v1107 = vadd.f32 %v1087, %v1106
    %1108 = vmatmul.f32.gmra.mxu0 %v1036
    %v1109 = vpop.f32.mrf.mxu0
    %v1110 = vadd.f32 %v1087, %v1109
    %1111 = vmatmul.f32.gmra.mxu0 %v1037
    %v1112 = vpop.f32.mrf.mxu0
    %v1113 = vadd.f32 %v1087, %v1112
    %1114 = vmatmul.f32.gmra.mxu0 %v1038
    %v1115 = vpop.f32.mrf.mxu0
    %v1116 = vadd.f32 %v1087, %v1115
    %1117 = vmatmul.f32.gmra.mxu0 %v1039
    %v1118 = vpop.f32.mrf.mxu0
    %v1119 = vadd.f32 %v1087, %v1118
    %1120 = vmatmul.f32.gmra.mxu0 %v1040
    %v1121 = vpop.f32.mrf.mxu0
    %v1122 = vadd.f32 %v1087, %v1121
    %1123 = vmatmul.f32.gmra.mxu0 %v1041
    %v1124 = vpop.f32.mrf.mxu0
    %v1125 = vadd.f32 %v1087, %v1124
    %1126 = vmatmul.f32.gmra.mxu0 %v1042
    %v1127 = vpop.f32.mrf.mxu0
    %v1128 = vadd.f32 %v1087, %v1127
    %1129 = vmatmul.f32.gmra.mxu0 %v1043
    %v1130 = vpop.f32.mrf.mxu0
    %v1131 = vadd.f32 %v1087, %v1130
    %1132 = vmatmul.f32.gmra.mxu0 %v1044
    %v1133 = vpop.f32.mrf.mxu0
    %v1134 = vadd.f32 %v1087, %v1133
    %1135 = vmatmul.f32.gmra.mxu0 %v1045
    %v1136 = vpop.f32.mrf.mxu0
    %v1137 = vadd.f32 %v1087, %v1136
    %1138 = vmatmul.f32.gmra.mxu0 %v1046
    %v1139 = vpop.f32.mrf.mxu0
    %v1140 = vadd.f32 %v1087, %v1139
    %1141 = vmatmul.f32.gmra.mxu0 %v1047
    %v1142 = vpop.f32.mrf.mxu0
    %v1143 = vadd.f32 %v1087, %v1142
    %1144 = vmatmul.f32.gmra.mxu0 %v1048
    %v1145 = vpop.f32.mrf.mxu0
    %v1146 = vadd.f32 %v1087, %v1145
    %1147 = vmatmul.f32.gmra.mxu0 %v1049
    %v1148 = vpop.f32.mrf.mxu0
    %v1149 = vadd.f32 %v1087, %v1148
    %1150 = vmatmul.f32.gmra.mxu0 %v1050
    %v1151 = vpop.f32.mrf.mxu0
    %v1152 = vadd.f32 %v1087, %v1151
    %1153 = vmatmul.f32.gmra.mxu0 %v1051
    %v1154 = vpop.f32.mrf.mxu0
    %v1155 = vadd.f32 %v1087, %v1154
    %1156 = vmatmul.f32.gmra.mxu0 %v1052
    %v1157 = vpop.f32.mrf.mxu0
    %v1158 = vadd.f32 %v1087, %v1157
    %1159 = vmatmul.f32.gmra.mxu0 %v1053
    %v1160 = vpop.f32.mrf.mxu0
    %v1161 = vadd.f32 %v1087, %v1160
    %1162 = vmatmul.f32.gmra.mxu0 %v1054
    %v1163 = vpop.f32.mrf.mxu0
    %v1164 = vadd.f32 %v1087, %v1163
    %1165 = vmatmul.f32.gmra.mxu0 %v1055
    %v1166 = vpop.f32.mrf.mxu0
    %v1167 = vadd.f32 %v1087, %v1166
    %1168 = vmatmul.f32.gmra.mxu0 %v1056
    %v1169 = vpop.f32.mrf.mxu0
    %v1170 = vadd.f32 %v1087, %v1169
    %1171 = vmatmul.f32.gmra.mxu0 %v1057
    %v1172 = vpop.f32.mrf.mxu0
    %v1173 = vadd.f32 %v1087, %v1172
    %1174 = vmatmul.f32.gmra.mxu0 %v1058
    %v1175 = vpop.f32.mrf.mxu0
    %v1176 = vadd.f32 %v1087, %v1175
    %1177 = vmatmul.f32.gmra.mxu0 %v1059
    %v1178 = vpop.f32.mrf.mxu0
    %v1179 = vadd.f32 %v1087, %v1178
    %1180 = vmatmul.f32.gmra.mxu0 %v1060
    %v1181 = vpop.f32.mrf.mxu0
    %v1182 = vadd.f32 %v1087, %v1181
    %1183 = vmatmul.f32.gmra.mxu0 %v1061
    %v1184 = vpop.f32.mrf.mxu0
    %v1185 = vadd.f32 %v1087, %v1184
    %1186 = vmatmul.f32.gmra.mxu0 %v1062
    %v1187 = vpop.f32.mrf.mxu0
    %v1188 = vadd.f32 %v1087, %v1187
    %1189 = vmatmul.f32.gmra.mxu0 %v1063
    %v1190 = vpop.f32.mrf.mxu0
    %v1191 = vadd.f32 %v1087, %v1190
    %1192 = vmatmul.f32.gmra.mxu0 %v1064
    %v1193 = vpop.f32.mrf.mxu0
    %v1194 = vadd.f32 %v1087, %v1193
    %1195 = vmatmul.f32.gmra.mxu0 %v1065
    %v1196 = vpop.f32.mrf.mxu0
    %v1197 = vadd.f32 %v1087, %v1196
    %1198 = vmatmul.f32.gmra.mxu0 %v1066
    %v1199 = vpop.f32.mrf.mxu0
    %v1200 = vadd.f32 %v1087, %v1199
    %1201 = vdwg.mxu0
    %v1202 = vmax.f32 %v1107, 0.0
    %v1203 = vmax.f32 %v1110, 0.0
    %v1204 = vmax.f32 %v1113, 0.0
    %v1205 = vmax.f32 %v1116, 0.0
    %v1206 = vmax.f32 %v1119, 0.0
    %v1207 = vmax.f32 %v1122, 0.0
    %v1208 = vmax.f32 %v1125, 0.0
    %v1209 = vmax.f32 %v1128, 0.0
    %v1210 = vmax.f32 %v1131, 0.0
    %v1211 = vmax.f32 %v1134, 0.0
    %v1212 = vmax.f32 %v1137, 0.0
    %v1213 = vmax.f32 %v1140, 0.0
    %v1214 = vmax.f32 %v1143, 0.0
    %v1215 = vmax.f32 %v1146, 0.0
    %v1216 = vmax.f32 %v1149, 0.0
    %v1217 = vmax.f32 %v1152, 0.0
    %v1218 = vmax.f32 %v1155, 0.0
    %v1219 = vmax.f32 %v1158, 0.0
    %v1220 = vmax.f32 %v1161, 0.0
    %v1221 = vmax.f32 %v1164, 0.0
    %v1222 = vmax.f32 %v1167, 0.0
    %v1223 = vmax.f32 %v1170, 0.0
    %v1224 = vmax.f32 %v1173, 0.0
    %v1225 = vmax.f32 %v1176, 0.0
    %v1226 = vmax.f32 %v1179, 0.0
    %v1227 = vmax.f32 %v1182, 0.0
    %v1228 = vmax.f32 %v1185, 0.0
    %v1229 = vmax.f32 %v1188, 0.0
    %v1230 = vmax.f32 %v1191, 0.0
    %v1231 = vmax.f32 %v1194, 0.0
    %v1232 = vmax.f32 %v1197, 0.0
    %v1233 = vmax.f32 %v1200, 0.0
    %s1234 = scalar_lea.vmem [#allocation5], 256
    %v1235 = vld [vmem:[%s1234] sm:$0xff]
    %v1236 = vld [vmem:[%s1234 + $0x8] sm:$0xff]
    %v1237 = vld [vmem:[%s1234 + $0x10] sm:$0xff]
    %v1238 = vld [vmem:[%s1234 + $0x18] sm:$0xff]
    %v1239 = vld [vmem:[%s1234 + $0x20] sm:$0xff]
    %v1240 = vld [vmem:[%s1234 + $0x28] sm:$0xff]
    %v1241 = vld [vmem:[%s1234 + $0x30] sm:$0xff]
    %v1242 = vld [vmem:[%s1234 + $0x38] sm:$0xff]
    %v1243 = vld [vmem:[%s1234 + $0x40] sm:$0xff]
    %v1244 = vld [vmem:[%s1234 + $0x48] sm:$0xff]
    %v1245 = vld [vmem:[%s1234 + $0x50] sm:$0xff]
    %v1246 = vld [vmem:[%s1234 + $0x58] sm:$0xff]
    %v1247 = vld [vmem:[%s1234 + $0x60] sm:$0xff]
    %v1248 = vld [vmem:[%s1234 + $0x68] sm:$0xff]
    %v1249 = vld [vmem:[%s1234 + $0x70] sm:$0xff]
    %v1250 = vld [vmem:[%s1234 + $0x78] sm:$0xff]
    %s1251 = scalar_lea.vmem %s6, 2
    %v1252 = vld [vmem:[%s1251] sm:$0x1]
    %v1254 = vperm.slane %v1252, 0
    %1256 = vmatpush.msra.mxu0 %v1250
    %1257 = vmatpush.msra.mxu0 %v1249
    %1258 = vmatpush.msra.mxu0 %v1248
    %1259 = vmatpush.msra.mxu0 %v1247
    %1260 = vmatpush.msra.mxu0 %v1246
    %1261 = vmatpush.msra.mxu0 %v1245
    %1262 = vmatpush.msra.mxu0 %v1244
    %1263 = vmatpush.msra.mxu0 %v1243
    %1264 = vmatpush.msra.mxu0 %v1242
    %1265 = vmatpush.msra.mxu0 %v1241
    %1266 = vmatpush.msra.mxu0 %v1240
    %1267 = vmatpush.msra.mxu0 %v1239
    %1268 = vmatpush.msra.mxu0 %v1238
    %1269 = vmatpush.msra.mxu0 %v1237
    %1270 = vmatpush.msra.mxu0 %v1236
    %1271 = vmatpush.msra.mxu0 %v1235
    %1272 = vmatmul.f32.gmra.mxu0 %v1202
    %v1273 = vpop.f32.mrf.mxu0
    %v1274 = vadd.f32 %v1254, %v1273
    %1275 = vmatmul.f32.gmra.mxu0 %v1203
    %v1276 = vpop.f32.mrf.mxu0
    %v1277 = vadd.f32 %v1254, %v1276
    %1278 = vmatmul.f32.gmra.mxu0 %v1204
    %v1279 = vpop.f32.mrf.mxu0
    %v1280 = vadd.f32 %v1254, %v1279
    %1281 = vmatmul.f32.gmra.mxu0 %v1205
    %v1282 = vpop.f32.mrf.mxu0
    %v1283 = vadd.f32 %v1254, %v1282
    %1284 = vmatmul.f32.gmra.mxu0 %v1206
    %v1285 = vpop.f32.mrf.mxu0
    %v1286 = vadd.f32 %v1254, %v1285
    %1287 = vmatmul.f32.gmra.mxu0 %v1207
    %v1288 = vpop.f32.mrf.mxu0
    %v1289 = vadd.f32 %v1254, %v1288
    %1290 = vmatmul.f32.gmra.mxu0 %v1208
    %v1291 = vpop.f32.mrf.mxu0
    %v1292 = vadd.f32 %v1254, %v1291
    %1293 = vmatmul.f32.gmra.mxu0 %v1209
    %v1294 = vpop.f32.mrf.mxu0
    %v1295 = vadd.f32 %v1254, %v1294
    %1296 = vmatmul.f32.gmra.mxu0 %v1210
    %v1297 = vpop.f32.mrf.mxu0
    %v1298 = vadd.f32 %v1254, %v1297
    %1299 = vmatmul.f32.gmra.mxu0 %v1211
    %v1300 = vpop.f32.mrf.mxu0
    %v1301 = vadd.f32 %v1254, %v1300
    %1302 = vmatmul.f32.gmra.mxu0 %v1212
    %v1303 = vpop.f32.mrf.mxu0
    %v1304 = vadd.f32 %v1254, %v1303
    %1305 = vmatmul.f32.gmra.mxu0 %v1213
    %v1306 = vpop.f32.mrf.mxu0
    %v1307 = vadd.f32 %v1254, %v1306
    %1308 = vmatmul.f32.gmra.mxu0 %v1214
    %v1309 = vpop.f32.mrf.mxu0
    %v1310 = vadd.f32 %v1254, %v1309
    %1311 = vmatmul.f32.gmra.mxu0 %v1215
    %v1312 = vpop.f32.mrf.mxu0
    %v1313 = vadd.f32 %v1254, %v1312
    %1314 = vmatmul.f32.gmra.mxu0 %v1216
    %v1315 = vpop.f32.mrf.mxu0
    %v1316 = vadd.f32 %v1254, %v1315
    %1317 = vmatmul.f32.gmra.mxu0 %v1217
    %v1318 = vpop.f32.mrf.mxu0
    %v1319 = vadd.f32 %v1254, %v1318
    %1320 = vmatmul.f32.gmra.mxu0 %v1218
    %v1321 = vpop.f32.mrf.mxu0
    %v1322 = vadd.f32 %v1254, %v1321
    %1323 = vmatmul.f32.gmra.mxu0 %v1219
    %v1324 = vpop.f32.mrf.mxu0
    %v1325 = vadd.f32 %v1254, %v1324
    %1326 = vmatmul.f32.gmra.mxu0 %v1220
    %v1327 = vpop.f32.mrf.mxu0
    %v1328 = vadd.f32 %v1254, %v1327
    %1329 = vmatmul.f32.gmra.mxu0 %v1221
    %v1330 = vpop.f32.mrf.mxu0
    %v1331 = vadd.f32 %v1254, %v1330
    %1332 = vmatmul.f32.gmra.mxu0 %v1222
    %v1333 = vpop.f32.mrf.mxu0
    %v1334 = vadd.f32 %v1254, %v1333
    %1335 = vmatmul.f32.gmra.mxu0 %v1223
    %v1336 = vpop.f32.mrf.mxu0
    %v1337 = vadd.f32 %v1254, %v1336
    %1338 = vmatmul.f32.gmra.mxu0 %v1224
    %v1339 = vpop.f32.mrf.mxu0
    %v1340 = vadd.f32 %v1254, %v1339
    %1341 = vmatmul.f32.gmra.mxu0 %v1225
    %v1342 = vpop.f32.mrf.mxu0
    %v1343 = vadd.f32 %v1254, %v1342
    %1344 = vmatmul.f32.gmra.mxu0 %v1226
    %v1345 = vpop.f32.mrf.mxu0
    %v1346 = vadd.f32 %v1254, %v1345
    %1347 = vmatmul.f32.gmra.mxu0 %v1227
    %v1348 = vpop.f32.mrf.mxu0
    %v1349 = vadd.f32 %v1254, %v1348
    %1350 = vmatmul.f32.gmra.mxu0 %v1228
    %v1351 = vpop.f32.mrf.mxu0
    %v1352 = vadd.f32 %v1254, %v1351
    %1353 = vmatmul.f32.gmra.mxu0 %v1229
    %v1354 = vpop.f32.mrf.mxu0
    %v1355 = vadd.f32 %v1254, %v1354
    %1356 = vmatmul.f32.gmra.mxu0 %v1230
    %v1357 = vpop.f32.mrf.mxu0
    %v1358 = vadd.f32 %v1254, %v1357
    %1359 = vmatmul.f32.gmra.mxu0 %v1231
    %v1360 = vpop.f32.mrf.mxu0
    %v1361 = vadd.f32 %v1254, %v1360
    %1362 = vmatmul.f32.gmra.mxu0 %v1232
    %v1363 = vpop.f32.mrf.mxu0
    %v1364 = vadd.f32 %v1254, %v1363
    %1365 = vmatmul.f32.gmra.mxu0 %v1233
    %v1366 = vpop.f32.mrf.mxu0
    %v1367 = vadd.f32 %v1254, %v1366
    %1368 = vdwg.mxu0
    %v1369 = vadd.f32 %v1274, %v1035
    %v1370 = vadd.f32 %v1277, %v1036
    %v1371 = vadd.f32 %v1280, %v1037
    %v1372 = vadd.f32 %v1283, %v1038
    %v1373 = vadd.f32 %v1286, %v1039
    %v1374 = vadd.f32 %v1289, %v1040
    %v1375 = vadd.f32 %v1292, %v1041
    %v1376 = vadd.f32 %v1295, %v1042
    %v1377 = vadd.f32 %v1298, %v1043
    %v1378 = vadd.f32 %v1301, %v1044
    %v1379 = vadd.f32 %v1304, %v1045
    %v1380 = vadd.f32 %v1307, %v1046
    %v1381 = vadd.f32 %v1310, %v1047
    %v1382 = vadd.f32 %v1313, %v1048
    %v1383 = vadd.f32 %v1316, %v1049
    %v1384 = vadd.f32 %v1319, %v1050
    %v1385 = vadd.f32 %v1322, %v1051
    %v1386 = vadd.f32 %v1325, %v1052
    %v1387 = vadd.f32 %v1328, %v1053
    %v1388 = vadd.f32 %v1331, %v1054
    %v1389 = vadd.f32 %v1334, %v1055
    %v1390 = vadd.f32 %v1337, %v1056
    %v1391 = vadd.f32 %v1340, %v1057
    %v1392 = vadd.f32 %v1343, %v1058
    %v1393 = vadd.f32 %v1346, %v1059
    %v1394 = vadd.f32 %v1349, %v1060
    %v1395 = vadd.f32 %v1352, %v1061
    %v1396 = vadd.f32 %v1355, %v1062
    %v1397 = vadd.f32 %v1358, %v1063
    %v1398 = vadd.f32 %v1361, %v1064
    %v1399 = vadd.f32 %v1364, %v1065
    %v1400 = vadd.f32 %v1367, %v1066
    %v1401 = vmax.f32 %v1369, 0.0
    %v1402 = vmax.f32 %v1370, 0.0
    %v1403 = vmax.f32 %v1371, 0.0
    %v1404 = vmax.f32 %v1372, 0.0
    %v1405 = vmax.f32 %v1373, 0.0
    %v1406 = vmax.f32 %v1374, 0.0
    %v1407 = vmax.f32 %v1375, 0.0
    %v1408 = vmax.f32 %v1376, 0.0
    %v1409 = vmax.f32 %v1377, 0.0
    %v1410 = vmax.f32 %v1378, 0.0
    %v1411 = vmax.f32 %v1379, 0.0
    %v1412 = vmax.f32 %v1380, 0.0
    %v1413 = vmax.f32 %v1381, 0.0
    %v1414 = vmax.f32 %v1382, 0.0
    %v1415 = vmax.f32 %v1383, 0.0
    %v1416 = vmax.f32 %v1384, 0.0
    %v1417 = vmax.f32 %v1385, 0.0
    %v1418 = vmax.f32 %v1386, 0.0
    %v1419 = vmax.f32 %v1387, 0.0
    %v1420 = vmax.f32 %v1388, 0.0
    %v1421 = vmax.f32 %v1389, 0.0
    %v1422 = vmax.f32 %v1390, 0.0
    %v1423 = vmax.f32 %v1391, 0.0
    %v1424 = vmax.f32 %v1392, 0.0
    %v1425 = vmax.f32 %v1393, 0.0
    %v1426 = vmax.f32 %v1394, 0.0
    %v1427 = vmax.f32 %v1395, 0.0
    %v1428 = vmax.f32 %v1396, 0.0
    %v1429 = vmax.f32 %v1397, 0.0
    %v1430 = vmax.f32 %v1398, 0.0
    %v1431 = vmax.f32 %v1399, 0.0
    %v1432 = vmax.f32 %v1400, 0.0
    %1433 = vst [vmem:[#allocation7] sm:$0xff] %v1401
    %1434 = vst [vmem:[#allocation7 + $0x8] sm:$0xff] %v1402
    %1435 = vst [vmem:[#allocation7 + $0x10] sm:$0xff] %v1403
    %1436 = vst [vmem:[#allocation7 + $0x18] sm:$0xff] %v1404
    %1437 = vst [vmem:[#allocation7 + $0x20] sm:$0xff] %v1405
    %1438 = vst [vmem:[#allocation7 + $0x28] sm:$0xff] %v1406
    %1439 = vst [vmem:[#allocation7 + $0x30] sm:$0xff] %v1407
    %1440 = vst [vmem:[#allocation7 + $0x38] sm:$0xff] %v1408
    %1441 = vst [vmem:[#allocation7 + $0x40] sm:$0xff] %v1409
    %1442 = vst [vmem:[#allocation7 + $0x48] sm:$0xff] %v1410
    %1443 = vst [vmem:[#allocation7 + $0x50] sm:$0xff] %v1411
    %1444 = vst [vmem:[#allocation7 + $0x58] sm:$0xff] %v1412
    %1445 = vst [vmem:[#allocation7 + $0x60] sm:$0xff] %v1413
    %1446 = vst [vmem:[#allocation7 + $0x68] sm:$0xff] %v1414
    %1447 = vst [vmem:[#allocation7 + $0x70] sm:$0xff] %v1415
    %1448 = vst [vmem:[#allocation7 + $0x78] sm:$0xff] %v1416
    %1449 = vst [vmem:[#allocation7 + $0x80] sm:$0xff] %v1417
    %1450 = vst [vmem:[#allocation7 + $0x88] sm:$0xff] %v1418
    %1451 = vst [vmem:[#allocation7 + $0x90] sm:$0xff] %v1419
    %1452 = vst [vmem:[#allocation7 + $0x98] sm:$0xff] %v1420
    %1453 = vst [vmem:[#allocation7 + $0xa0] sm:$0xff] %v1421
    %1454 = vst [vmem:[#allocation7 + $0xa8] sm:$0xff] %v1422
    %1455 = vst [vmem:[#allocation7 + $0xb0] sm:$0xff] %v1423
    %1456 = vst [vmem:[#allocation7 + $0xb8] sm:$0xff] %v1424
    %1457 = vst [vmem:[#allocation7 + $0xc0] sm:$0xff] %v1425
    %1458 = vst [vmem:[#allocation7 + $0xc8] sm:$0xff] %v1426
    %1459 = vst [vmem:[#allocation7 + $0xd0] sm:$0xff] %v1427
    %1460 = vst [vmem:[#allocation7 + $0xd8] sm:$0xff] %v1428
    %1461 = vst [vmem:[#allocation7 + $0xe0] sm:$0xff] %v1429
    %1462 = vst [vmem:[#allocation7 + $0xe8] sm:$0xff] %v1430
    %1463 = vst [vmem:[#allocation7 + $0xf0] sm:$0xff] %v1431
    %1464 = vst [vmem:[#allocation7 + $0xf8] sm:$0xff] %v1432
    // Predicated region
    $region38: #{tpu_custom_call.1} parent=1 // pred_check
      _
    $region39: #{tpu_custom_call.1} parent=1 // pred_check_branch
      %1466 = sbr.rel (0) target = $region41
    $region40: #{tpu_custom_call.1} parent=1 // pred_region
      %1468 = vsyncadd [#allocation4], 0
      %s1469 = sshll.u32 [#allocation7], 4
      %s1470 = int_to_ptr.vmem [resolvable:$true] %s1469
      %s1471 = sshll.u32 %s7, 4
      %s1472 = int_to_ptr.hbm [resolvable:$true] %s1471
      %1477 = dma.vmem_to_hbm [thread:$0]  %s1470, 4096, %s1472, [#allocation4], 128, 128, 8
    $region41: #{tpu_custom_call.1} parent=1 // pred_fallthru
      _
    // Predicated region
    $region42: #{tpu_custom_call.1} parent=1 // pred_check
      _
    $region43: #{tpu_custom_call.1} parent=1 // pred_check_branch
      %1479 = sbr.rel (0) target = $region45
    $region44: #{tpu_custom_call.1} parent=1 // pred_region
      %1481 = dma.done [#allocation4], 4096
    $region45: #{tpu_custom_call.1} parent=1 // pred_fallthru
      _
    %1482 = vsyncpa [#allocation3], 1
    %1483 = vsyncpa [#allocation6], 1
    %1484 = vsyncpa [#allocation4], 1

</llo_original>
